<compile_context>
chip_gen: v5e
topology: v5e:2x2
jax: 0.10.0
libtpu: 0.0.40
codegen_flags: <defaults>
</compile_context>

<pallas_src>
import jax
import jax.numpy as jnp
from jax import lax
from jax.experimental import pallas as pl
from jax.experimental.pallas import tpu as pltpu


def conv_stats_kernel(x_ref, w_ref, conv_ref, stats_ref):
    """4 accumulating MXU matmuls over tap-shifted views of one haloed block.

    x_ref     : (th+1, W+1, Cin)  bf16  input rows [i*th, i*th+th] with one
                                        zero halo row/column on the high side
    w_ref     : (4, Cin, C4p)     bf16  per-tap phase-packed (flipped) weights
    conv_ref  : (th, W, C4p)      bf16  pre-BN conv output (phase-packed, lane-dense)
    stats_ref : (2, C4p)          f32   row 0 = column sums, row 1 = column sums of sq
    """
    th1, wp, cin = x_ref.shape
    th, w = th1 - 1, wp - 1
    c4p = conv_ref.shape[-1]
    rows = th * w

    x = x_ref[...]                                    # (th+1, W+1, Cin) bf16

    def tap(r0, c0):                                  # shifted view -> matmul lhs
        return x[r0:r0 + th, c0:c0 + w, :].reshape(rows, cin)

    acc = jnp.dot(tap(0, 0), w_ref[0], preferred_element_type=jnp.float32)
    acc += jnp.dot(tap(0, 1), w_ref[1], preferred_element_type=jnp.float32)
    acc += jnp.dot(tap(1, 0), w_ref[2], preferred_element_type=jnp.float32)
    acc += jnp.dot(tap(1, 1), w_ref[3], preferred_element_type=jnp.float32)

    conv_ref[...] = acc.reshape(th, w, c4p).astype(conv_ref.dtype)
    # partial BN statistics in f32 (folded across tiles/phases in the wrapper);
    # direct row stores, no concatenate/reshape epilogue.
    stats_ref[0:1, :] = jnp.sum(acc, axis=0, keepdims=True)
    stats_ref[1:2, :] = jnp.sum(acc * acc, axis=0, keepdims=True)


def bn_relu_kernel(conv_ref, scale_ref, shift_ref, o_ref):
    """Pure fused multiply-add + ReLU stream; scale/shift precomputed once.

    conv_ref  : (th, W, C4p) bf16   pre-BN conv tile (phase-packed)
    scale_ref : (1, C4p)     f32    per packed column BN scale (0 in lane padding)
    shift_ref : (1, C4p)     f32    per packed column BN shift (0 in lane padding)
    o_ref     : (th, W, C4p) bf16   output tile (aliased onto conv_ref's buffer)
    """
    y = conv_ref[...].astype(jnp.float32) * scale_ref[...] + shift_ref[...]
    o_ref[...] = jnp.maximum(y, 0.0).astype(o_ref.dtype)


# (tap index t, original-weight kh, kw) contributing to each output phase.
# phase p = 2*(oh % 2) + (ow % 2); taps t are x[r,c], x[r,c+1], x[r+1,c], x[r+1,c+1]
_PHASE_TAPS = {
    0: [(0, 1, 1)],
    1: [(0, 1, 2), (1, 1, 0)],
    2: [(0, 2, 1), (2, 0, 1)],
    3: [(0, 2, 2), (1, 2, 0), (2, 0, 2), (3, 0, 0)],
}


def upsampler_block(x_nchw, w_pt, b, gamma, beta, *, tile_rows=1024):
    """x_nchw: (N, Cin, H, W).  w_pt: (Cin, Cout, 3, 3) (PyTorch ConvTranspose2d layout).
    Returns (N, Cout, 2H, 2W) float32, matching the PyTorch module's NCHW output."""
    N, Cin, H, W = x_nchw.shape
    Cout = w_pt.shape[1]
    C4 = 4 * Cout
    C4p = ((C4 + 127) // 128) * 128          # lane-dense packed output width
    del b                                    # cancelled exactly by train-mode BN mean

    # H-tile: ~tile_rows matmul rows per grid step; th must divide H.
    th = max(1, min(H, tile_rows // max(W, 1)))
    while H % th:
        th -= 1
    n_h = H // th
    G = N * n_h                              # grid steps ("parallel", shards across TCs)
    Wp = W + 1

    # glue (bf16): NCHW -> NHWC, zero-pad high side, gather haloed H tiles
    x_nhwc = jnp.transpose(x_nchw, (0, 2, 3, 1)).astype(jnp.bfloat16)
    xp = jnp.pad(x_nhwc, ((0, 0), (0, 1), (0, 1), (0, 0)))       # (N, H+1, W+1, Cin)
    body = xp[:, :H].reshape(N, n_h, th, Wp, Cin)
    halo = xp[:, th::th][:, :, None]                              # (N, n_h, 1, Wp, Cin)
    x_tiles = jnp.concatenate([body, halo], axis=2).reshape(G, th + 1, Wp, Cin)

    # glue: per-tap phase-packed weight slab (4, Cin, C4p); unused/padded cols stay 0
    w_slab = jnp.zeros((4, Cin, C4p), jnp.float32)
    for p, entries in _PHASE_TAPS.items():
        for (t, kh, kw) in entries:
            w_slab = w_slab.at[t, :, p * Cout:(p + 1) * Cout].set(
                w_pt[:, :, kh, kw].astype(jnp.float32))
    w_slab = w_slab.astype(jnp.bfloat16)

    cparams = pltpu.CompilerParams(dimension_semantics=("parallel",))

    # pass 1: conv matmuls + per-tile partial BN statistics
    conv_packed, stats = pl.pallas_call(
        conv_stats_kernel,
        out_shape=(jax.ShapeDtypeStruct((G, th, W, C4p), jnp.bfloat16),
                   jax.ShapeDtypeStruct((G, 2, C4p), jnp.float32)),
        grid=(G,),
        in_specs=[pl.BlockSpec((None, th + 1, Wp, Cin), lambda g: (g, 0, 0, 0)),
                  pl.BlockSpec((4, Cin, C4p), lambda g: (0, 0, 0))],
        out_specs=(pl.BlockSpec((None, th, W, C4p), lambda g: (g, 0, 0, 0)),
                   pl.BlockSpec((None, 2, C4p), lambda g: (g, 0, 0))),
        compiler_params=cparams,
    )(x_tiles, w_slab)

    # tiny JAX fold: per-tile stats -> per-packed-column BN scale / shift
    totals = jnp.sum(stats, axis=0)                               # (2, C4p)
    s = totals[0, :C4].reshape(4, Cout).sum(axis=0)
    q = totals[1, :C4].reshape(4, Cout).sum(axis=0)
    count = float(N * (2 * H) * (2 * W))                          # true BN element count
    mean = s / count
    # NOTE: single-pass E[x^2]-E[x]^2 in f32; fine here, switch to a centered
    # formulation if activation means become huge relative to their std.
    var = q / count - mean * mean
    scale = gamma.astype(jnp.float32) * lax.rsqrt(var + 0.001)
    shift = beta.astype(jnp.float32) - mean * scale
    scale4 = jnp.pad(jnp.tile(scale, 4), (0, C4p - C4)).reshape(1, C4p)
    shift4 = jnp.pad(jnp.tile(shift, 4), (0, C4p - C4)).reshape(1, C4p)

    # pass 2: fused scale/shift + ReLU; output aliased onto conv_packed's buffer
    out_packed = pl.pallas_call(
        bn_relu_kernel,
        out_shape=jax.ShapeDtypeStruct((G, th, W, C4p), jnp.bfloat16),
        grid=(G,),
        in_specs=[pl.BlockSpec((None, th, W, C4p), lambda g: (g, 0, 0, 0)),
                  pl.BlockSpec((1, C4p), lambda g: (0, 0)),
                  pl.BlockSpec((1, C4p), lambda g: (0, 0))],
        out_specs=pl.BlockSpec((None, th, W, C4p), lambda g: (g, 0, 0, 0)),
        input_output_aliases={0: 0},
        compiler_params=cparams,
    )(conv_packed, scale4, shift4)

    # glue: single fused un-pack (phase interleave + NHWC->NCHW in ONE transpose)
    out6 = out_packed[..., :C4].reshape(N, H, W, 2, 2, Cout)
    out = jnp.transpose(out6, (0, 5, 1, 3, 2, 4)).reshape(N, Cout, 2 * H, 2 * W)
    return out.astype(jnp.float32)


def reference(x_nchw, w_pt, b, gamma, beta):
    """Pure-JAX f32 reference (training-mode BN, includes the conv bias)."""
    x_nhwc = jnp.transpose(x_nchw, (0, 2, 3, 1))
    w_k = jnp.transpose(jnp.flip(w_pt, axis=(2, 3)), (2, 3, 0, 1))  # HWIO, flipped
    y = lax.conv_general_dilated(
        x_nhwc, w_k, window_strides=(1, 1), padding=[(1, 2), (1, 2)],
        lhs_dilation=(2, 2),
        dimension_numbers=('NHWC', 'HWIO', 'NHWC'))
    y = y + b.reshape(1, 1, 1, -1)
    mean = jnp.mean(y, axis=(0, 1, 2), keepdims=True)
    var = jnp.mean((y - mean) ** 2, axis=(0, 1, 2), keepdims=True)
    y = (y - mean) * lax.rsqrt(var + 0.001)
    y = y * gamma.reshape(1, 1, 1, -1) + beta.reshape(1, 1, 1, -1)
    y = jnp.maximum(y, 0.0)
    return jnp.transpose(y, (0, 3, 1, 2))


if __name__ == "__main__":
    key = jax.random.PRNGKey(0)
    k_x, k_w, k_b, k_g, k_be = jax.random.split(key, 5)

    N, Cin, Cout, H, W = 2, 8, 16, 16, 16

    x = jax.random.normal(k_x, (N, Cin, H, W), jnp.float32)
    # ConvTranspose2d weight layout: (in_channels, out_channels, kH, kW)
    w = jax.random.normal(k_w, (Cin, Cout, 3, 3), jnp.float32) * 0.1
    b = jax.random.normal(k_b, (Cout,), jnp.float32) * 0.1
    gamma = 1.0 + 0.1 * jax.random.normal(k_g, (Cout,), jnp.float32)
    beta = 0.1 * jax.random.normal(k_be, (Cout,), jnp.float32)

    fwd = jax.jit(upsampler_block)
    out = jax.block_until_ready(fwd(x, w, b, gamma, beta))
    ref = jax.block_until_ready(reference(x, w, b, gamma, beta))

    assert out.shape == (N, Cout, 2 * H, 2 * W), out.shape
    err = float(jnp.max(jnp.abs(out - ref)))
    # bf16 MXU inputs + bf16 conv/output intermediates -> tolerance set accordingly
    assert jnp.allclose(out, ref, atol=3e-2, rtol=2e-2), f"max abs err {err}"

    print("KERNEL_OK")
</pallas_src>

<mosaic_0001>
module attributes {stable_mosaic.version = 11 : i64} {
  func.func @conv_stats_kernel(%arg0: i32, %arg1: memref<1x17x17x8xbf16, #tpu.memory_space<vmem>>, %arg2: memref<4x8x128xbf16, #tpu.memory_space<vmem>>, %arg3: memref<1x16x16x128xbf16, #tpu.memory_space<vmem>>, %arg4: memref<1x2x128xf32, #tpu.memory_space<vmem>>) attributes {dimension_semantics = [#tpu.dimension_semantics<parallel>], iteration_bounds = array<i64: 2>, scalar_prefetch = 0 : i64, scratch_operands = 0 : i64, tpu.core_type = #tpu.core_type<tc>, window_params = [{transform_indices = @transform_0, window_bounds = array<i64: 1, 17, 17, 8>}, {pipeline_mode = #tpu.pipeline_mode<synchronous>, transform_indices = @transform_1, window_bounds = array<i64: 4, 8, 128>}, {transform_indices = @transform_2, window_bounds = array<i64: 1, 16, 16, 128>}, {transform_indices = @transform_3, window_bounds = array<i64: 1, 2, 128>}]} {
    %c0 = arith.constant 0 : index
    %c0_0 = arith.constant 0 : index
    %c0_1 = arith.constant 0 : index
    %c0_2 = arith.constant 0 : index
    %0 = vector.load %arg1[%c0, %c0_0, %c0_1, %c0_2] : memref<1x17x17x8xbf16, #tpu.memory_space<vmem>>, vector<1x17x17x8xbf16>
    %1 = vector.shape_cast %0 : vector<1x17x17x8xbf16> to vector<17x17x8xbf16>
    %2 = vector.extract_strided_slice %1 {offsets = [0, 0, 0], sizes = [16, 16, 8], strides = [1, 1, 1]} : vector<17x17x8xbf16> to vector<16x16x8xbf16>
    %3 = vector.shape_cast %2 : vector<16x16x8xbf16> to vector<256x8xbf16>
    %c0_3 = arith.constant 0 : index
    %c0_4 = arith.constant 0 : index
    %c0_5 = arith.constant 0 : index
    %4 = vector.load %arg2[%c0_3, %c0_4, %c0_5] : memref<4x8x128xbf16, #tpu.memory_space<vmem>>, vector<1x8x128xbf16>
    %5 = vector.shape_cast %4 : vector<1x8x128xbf16> to vector<8x128xbf16>
    %cst = arith.constant dense<0.000000e+00> : vector<256x128xf32>
    %6 = tpu.matmul %3, %5, %cst {dimension_numbers = #tpu.dot_dimension_numbers<[1], [0], [0], [1], [0, 0, 1, 1], [], []>} : vector<256x8xbf16>, vector<8x128xbf16>, vector<256x128xf32> -> vector<256x128xf32>
    %7 = vector.extract_strided_slice %1 {offsets = [0, 1, 0], sizes = [16, 16, 8], strides = [1, 1, 1]} : vector<17x17x8xbf16> to vector<16x16x8xbf16>
    %8 = vector.shape_cast %7 : vector<16x16x8xbf16> to vector<256x8xbf16>
    %c1 = arith.constant 1 : index
    %c0_6 = arith.constant 0 : index
    %c0_7 = arith.constant 0 : index
    %9 = vector.load %arg2[%c1, %c0_6, %c0_7] : memref<4x8x128xbf16, #tpu.memory_space<vmem>>, vector<1x8x128xbf16>
    %10 = vector.shape_cast %9 : vector<1x8x128xbf16> to vector<8x128xbf16>
    %cst_8 = arith.constant dense<0.000000e+00> : vector<256x128xf32>
    %11 = tpu.matmul %8, %10, %cst_8 {dimension_numbers = #tpu.dot_dimension_numbers<[1], [0], [0], [1], [0, 0, 1, 1], [], []>} : vector<256x8xbf16>, vector<8x128xbf16>, vector<256x128xf32> -> vector<256x128xf32>
    %12 = arith.addf %6, %11 : vector<256x128xf32>
    %13 = vector.extract_strided_slice %1 {offsets = [1, 0, 0], sizes = [16, 16, 8], strides = [1, 1, 1]} : vector<17x17x8xbf16> to vector<16x16x8xbf16>
    %14 = vector.shape_cast %13 : vector<16x16x8xbf16> to vector<256x8xbf16>
    %c2 = arith.constant 2 : index
    %c0_9 = arith.constant 0 : index
    %c0_10 = arith.constant 0 : index
    %15 = vector.load %arg2[%c2, %c0_9, %c0_10] : memref<4x8x128xbf16, #tpu.memory_space<vmem>>, vector<1x8x128xbf16>
    %16 = vector.shape_cast %15 : vector<1x8x128xbf16> to vector<8x128xbf16>
    %cst_11 = arith.constant dense<0.000000e+00> : vector<256x128xf32>
    %17 = tpu.matmul %14, %16, %cst_11 {dimension_numbers = #tpu.dot_dimension_numbers<[1], [0], [0], [1], [0, 0, 1, 1], [], []>} : vector<256x8xbf16>, vector<8x128xbf16>, vector<256x128xf32> -> vector<256x128xf32>
    %18 = arith.addf %12, %17 : vector<256x128xf32>
    %19 = vector.extract_strided_slice %1 {offsets = [1, 1, 0], sizes = [16, 16, 8], strides = [1, 1, 1]} : vector<17x17x8xbf16> to vector<16x16x8xbf16>
    %20 = vector.shape_cast %19 : vector<16x16x8xbf16> to vector<256x8xbf16>
    %c3 = arith.constant 3 : index
    %c0_12 = arith.constant 0 : index
    %c0_13 = arith.constant 0 : index
    %21 = vector.load %arg2[%c3, %c0_12, %c0_13] : memref<4x8x128xbf16, #tpu.memory_space<vmem>>, vector<1x8x128xbf16>
    %22 = vector.shape_cast %21 : vector<1x8x128xbf16> to vector<8x128xbf16>
    %cst_14 = arith.constant dense<0.000000e+00> : vector<256x128xf32>
    %23 = tpu.matmul %20, %22, %cst_14 {dimension_numbers = #tpu.dot_dimension_numbers<[1], [0], [0], [1], [0, 0, 1, 1], [], []>} : vector<256x8xbf16>, vector<8x128xbf16>, vector<256x128xf32> -> vector<256x128xf32>
    %24 = arith.addf %18, %23 : vector<256x128xf32>
    %25 = vector.shape_cast %24 : vector<256x128xf32> to vector<16x16x128xf32>
    %26 = arith.truncf %25 : vector<16x16x128xf32> to vector<16x16x128xbf16>
    %c0_15 = arith.constant 0 : index
    %c0_16 = arith.constant 0 : index
    %c0_17 = arith.constant 0 : index
    %c0_18 = arith.constant 0 : index
    %27 = vector.load %arg3[%c0_15, %c0_16, %c0_17, %c0_18] : memref<1x16x16x128xbf16, #tpu.memory_space<vmem>>, vector<1x16x16x128xbf16>
    %28 = vector.shape_cast %27 : vector<1x16x16x128xbf16> to vector<16x16x128xbf16>
    %29 = vector.shape_cast %26 : vector<16x16x128xbf16> to vector<1x16x16x128xbf16>
    tpu.vector_store %arg3[%c0_15, %c0_16, %c0_17, %c0_18], %29 {strides = array<i32>} : memref<1x16x16x128xbf16, #tpu.memory_space<vmem>>, vector<1x16x16x128xbf16>,
    %cst_19 = arith.constant dense<0.000000e+00> : vector<128xf32>
    %30 = vector.multi_reduction <add>, %24, %cst_19 [0] : vector<256x128xf32> to vector<128xf32>
    %31 = vector.shape_cast %30 : vector<128xf32> to vector<1x128xf32>
    %c0_20 = arith.constant 0 : index
    %c0_21 = arith.constant 0 : index
    %c0_22 = arith.constant 0 : index
    %32 = vector.load %arg4[%c0_20, %c0_21, %c0_22] : memref<1x2x128xf32, #tpu.memory_space<vmem>>, vector<1x1x128xf32>
    %33 = vector.shape_cast %32 : vector<1x1x128xf32> to vector<1x128xf32>
    %34 = vector.shape_cast %31 : vector<1x128xf32> to vector<1x1x128xf32>
    tpu.vector_store %arg4[%c0_20, %c0_21, %c0_22], %34 {strides = array<i32>} : memref<1x2x128xf32, #tpu.memory_space<vmem>>, vector<1x1x128xf32>,
    %35 = arith.mulf %24, %24 : vector<256x128xf32>
    %cst_23 = arith.constant dense<0.000000e+00> : vector<128xf32>
    %36 = vector.multi_reduction <add>, %35, %cst_23 [0] : vector<256x128xf32> to vector<128xf32>
    %37 = vector.shape_cast %36 : vector<128xf32> to vector<1x128xf32>
    %c0_24 = arith.constant 0 : index
    %c1_25 = arith.constant 1 : index
    %c0_26 = arith.constant 0 : index
    %38 = vector.load %arg4[%c0_24, %c1_25, %c0_26] : memref<1x2x128xf32, #tpu.memory_space<vmem>>, vector<1x1x128xf32>
    %39 = vector.shape_cast %38 : vector<1x1x128xf32> to vector<1x128xf32>
    %40 = vector.shape_cast %37 : vector<1x128xf32> to vector<1x1x128xf32>
    tpu.vector_store %arg4[%c0_24, %c1_25, %c0_26], %40 {strides = array<i32>} : memref<1x2x128xf32, #tpu.memory_space<vmem>>, vector<1x1x128xf32>,
    return
  }
  func.func @transform_0(%arg0: i32) -> (i32, i32, i32, i32) {
    %c0_i32 = arith.constant 0 : i32
    %c0_i32_0 = arith.constant 0 : i32
    %c0_i32_1 = arith.constant 0 : i32
    %c0_i32_2 = arith.constant 0 : i32
    return %arg0, %c0_i32, %c0_i32_0, %c0_i32_1 : i32, i32, i32, i32
  }
  func.func @transform_1(%arg0: i32) -> (i32, i32, i32) {
    %c0_i32 = arith.constant 0 : i32
    %c0_i32_0 = arith.constant 0 : i32
    %c0_i32_1 = arith.constant 0 : i32
    %c0_i32_2 = arith.constant 0 : i32
    return %c0_i32, %c0_i32_0, %c0_i32_1 : i32, i32, i32
  }
  func.func @transform_2(%arg0: i32) -> (i32, i32, i32, i32) {
    %c0_i32 = arith.constant 0 : i32
    %c0_i32_0 = arith.constant 0 : i32
    %c0_i32_1 = arith.constant 0 : i32
    %c0_i32_2 = arith.constant 0 : i32
    return %arg0, %c0_i32, %c0_i32_0, %c0_i32_1 : i32, i32, i32, i32
  }
  func.func @transform_3(%arg0: i32) -> (i32, i32, i32) {
    %c0_i32 = arith.constant 0 : i32
    %c0_i32_0 = arith.constant 0 : i32
    %c0_i32_1 = arith.constant 0 : i32
    return %arg0, %c0_i32, %c0_i32_0 : i32, i32, i32
  }
}

module attributes {stable_mosaic.version = 11 : i64} {
  func.func @bn_relu_kernel(%arg0: i32, %arg1: memref<1x16x16x128xbf16, #tpu.memory_space<vmem>>, %arg2: memref<1x128xf32, #tpu.memory_space<vmem>>, %arg3: memref<1x128xf32, #tpu.memory_space<vmem>>, %arg4: memref<1x16x16x128xbf16, #tpu.memory_space<vmem>>) attributes {dimension_semantics = [#tpu.dimension_semantics<parallel>], iteration_bounds = array<i64: 2>, scalar_prefetch = 0 : i64, scratch_operands = 0 : i64, tpu.core_type = #tpu.core_type<tc>, window_params = [{transform_indices = @transform_0, window_bounds = array<i64: 1, 16, 16, 128>}, {pipeline_mode = #tpu.pipeline_mode<synchronous>, transform_indices = @transform_1, window_bounds = array<i64: 1, 128>}, {pipeline_mode = #tpu.pipeline_mode<synchronous>, transform_indices = @transform_2, window_bounds = array<i64: 1, 128>}, {transform_indices = @transform_3, window_bounds = array<i64: 1, 16, 16, 128>}]} {
    %c0 = arith.constant 0 : index
    %c0_0 = arith.constant 0 : index
    %c0_1 = arith.constant 0 : index
    %c0_2 = arith.constant 0 : index
    %0 = vector.load %arg1[%c0, %c0_0, %c0_1, %c0_2] : memref<1x16x16x128xbf16, #tpu.memory_space<vmem>>, vector<1x16x16x128xbf16>
    %1 = vector.shape_cast %0 : vector<1x16x16x128xbf16> to vector<16x16x128xbf16>
    %2 = arith.extf %1 : vector<16x16x128xbf16> to vector<16x16x128xf32>
    %c0_3 = arith.constant 0 : index
    %c0_4 = arith.constant 0 : index
    %3 = vector.load %arg2[%c0_3, %c0_4] : memref<1x128xf32, #tpu.memory_space<vmem>>, vector<1x128xf32>
    %4 = vector.shape_cast %3 : vector<1x128xf32> to vector<1x1x128xf32>
    %5 = vector.broadcast %4 : vector<1x1x128xf32> to vector<16x16x128xf32>
    %6 = arith.mulf %2, %5 : vector<16x16x128xf32>
    %c0_5 = arith.constant 0 : index
    %c0_6 = arith.constant 0 : index
    %7 = vector.load %arg3[%c0_5, %c0_6] : memref<1x128xf32, #tpu.memory_space<vmem>>, vector<1x128xf32>
    %8 = vector.shape_cast %7 : vector<1x128xf32> to vector<1x1x128xf32>
    %9 = vector.broadcast %8 : vector<1x1x128xf32> to vector<16x16x128xf32>
    %10 = arith.addf %6, %9 : vector<16x16x128xf32>
    %cst = arith.constant 0.000000e+00 : f32
    %11 = vector.broadcast %cst : f32 to vector<16x16x128xf32>
    %12 = arith.maximumf %10, %11 : vector<16x16x128xf32>
    %13 = arith.truncf %12 : vector<16x16x128xf32> to vector<16x16x128xbf16>
    %c0_7 = arith.constant 0 : index
    %c0_8 = arith.constant 0 : index
    %c0_9 = arith.constant 0 : index
    %c0_10 = arith.constant 0 : index
    %14 = vector.load %arg4[%c0_7, %c0_8, %c0_9, %c0_10] : memref<1x16x16x128xbf16, #tpu.memory_space<vmem>>, vector<1x16x16x128xbf16>
    %15 = vector.shape_cast %14 : vector<1x16x16x128xbf16> to vector<16x16x128xbf16>
    %16 = vector.shape_cast %13 : vector<16x16x128xbf16> to vector<1x16x16x128xbf16>
    tpu.vector_store %arg4[%c0_7, %c0_8, %c0_9, %c0_10], %16 {strides = array<i32>} : memref<1x16x16x128xbf16, #tpu.memory_space<vmem>>, vector<1x16x16x128xbf16>,
    return
  }
  func.func @transform_0(%arg0: i32) -> (i32, i32, i32, i32) {
    %c0_i32 = arith.constant 0 : i32
    %c0_i32_0 = arith.constant 0 : i32
    %c0_i32_1 = arith.constant 0 : i32
    %c0_i32_2 = arith.constant 0 : i32
    return %arg0, %c0_i32, %c0_i32_0, %c0_i32_1 : i32, i32, i32, i32
  }
  func.func @transform_1(%arg0: i32) -> (i32, i32) {
    %c0_i32 = arith.constant 0 : i32
    %c0_i32_0 = arith.constant 0 : i32
    %c0_i32_1 = arith.constant 0 : i32
    return %c0_i32, %c0_i32_0 : i32, i32
  }
  func.func @transform_2(%arg0: i32) -> (i32, i32) {
    %c0_i32 = arith.constant 0 : i32
    %c0_i32_0 = arith.constant 0 : i32
    %c0_i32_1 = arith.constant 0 : i32
    return %c0_i32, %c0_i32_0 : i32, i32
  }
  func.func @transform_3(%arg0: i32) -> (i32, i32, i32, i32) {
    %c0_i32 = arith.constant 0 : i32
    %c0_i32_0 = arith.constant 0 : i32
    %c0_i32_1 = arith.constant 0 : i32
    %c0_i32_2 = arith.constant 0 : i32
    return %arg0, %c0_i32, %c0_i32_0, %c0_i32_1 : i32, i32, i32, i32
  }
}

</mosaic_0001>

<llo_original>
// kernel: squeeze.20
$region0: #{squeeze.20}
  %s0 = inlined_call_operand.vmem [shape: f32[64], index: 0, kind: input, shape index: {}]
  %s1 = inlined_call_operand.vmem [shape: f32[4,16], index: 1, kind: output, shape index: {}]
  $region1: #{squeeze.20} parent=0
    #allocation0 [shape = 'u8[4096]{0}', space=vmem, size = 0x1000, scoped, tag = 'scoped mem for output reshape']
    #allocation1 [shape = 'u8[4096]{0}', space=vmem, size = 0x1000, scoped, tag = 'scoped mem for input reshape']
    %s3 = ssub.s32 2, 1
    %v4 = vld [vmem:[%s0] sm:%s3]
    %5 = vst [vmem:[#allocation1] sm:%s3] %v4
    %v6 = vld [vmem:[#allocation1] sm:$0x1]
    %vm7 = vcmask 130048
    %8 = vst.msk [vmem:[#allocation0] sm:$0x1] %vm7, %v6
    %v9 = vld [vmem:[#allocation1] sm:$0x1]
    %10 = vrot.lane.b32.xlu0 %v9, 112
    %v11 = vpop.permute.xlu0 %10
    %vm12 = vcmask 130048
    %s13 = scalar_lea.vmem [#allocation0], 1
    %14 = vst.msk [vmem:[%s13] sm:$0x1] %vm12, %v11
    %v15 = vld [vmem:[#allocation1] sm:$0x1]
    %16 = vrot.lane.b32.xlu0 %v15, 96
    %v17 = vpop.permute.xlu0 %16
    %vm18 = vcmask 130048
    %s19 = scalar_lea.vmem [#allocation0], 2
    %20 = vst.msk [vmem:[%s19] sm:$0x1] %vm18, %v17
    %v21 = vld [vmem:[#allocation1] sm:$0x1]
    %22 = vrot.lane.b32.xlu0 %v21, 80
    %v23 = vpop.permute.xlu0 %22
    %vm24 = vcmask 130048
    %s25 = scalar_lea.vmem [#allocation0], 3
    %26 = vst.msk [vmem:[%s25] sm:$0x1] %vm24, %v23
    %s28 = ssub.s32 16, 1
    %v29 = vld [vmem:[#allocation0] sm:%s28]
    %s31 = ssub.s32 16, 1
    %32 = vst [vmem:[%s1] sm:%s31] %v29

// kernel: tile.18
$region0: #{tile.18}
  #allocation0 [shape = 's32[1]{0}', space=sflag, size = 0x4, scoped, tag = 'scoped memory for tile.18']
  %s0 = inlined_call_operand.vmem [shape: f32[16], index: 0, kind: input, shape index: {}]
  %s1 = inlined_call_operand.vmem [shape: f32[4,16], index: 1, kind: output, shape index: {}]
  // Predicated region
  $region2: #{tile.18} parent=0 // pred_check
    _
  $region3: #{tile.18} parent=0 // pred_check_branch
    %3 = sbr.rel (0) target = $region5
  $region4: #{tile.18} parent=0 // pred_region
    _
  $region5: #{tile.18} parent=0 // pred_fallthru
    _
  %v4 = vld [vmem:[%s0] ss:$0 sm:$0xff]
  %5 = vst [vmem:[%s1] sm:$0xf] %v4

// kernel: tile.19
$region0: #{tile.19}
  %s0 = inlined_call_operand.vmem [shape: f32[4,16], index: 0, kind: input, shape index: {}]
  %s1 = inlined_call_operand.vmem [shape: f32[64], index: 1, kind: output, shape index: {}]
  $region1: #{tile.19} parent=0
    #allocation0 [shape = 'u8[4096]{0}', space=vmem, size = 0x1000, scoped, tag = 'scoped mem for output reshape']
    #allocation1 [shape = 'u8[4096]{0}', space=vmem, size = 0x1000, scoped, tag = 'scoped mem for input reshape']
    %s3 = ssub.s32 16, 1
    %v4 = vld [vmem:[%s0] sm:%s3]
    %5 = vst [vmem:[#allocation1] sm:%s3] %v4
    %v6 = vld [vmem:[#allocation1] sm:$0x1]
    %vm7 = vcmask 130048
    %8 = vst.msk [vmem:[#allocation0] sm:$0x1] %vm7, %v6
    %s9 = scalar_lea.vmem [#allocation1], 3
    %v10 = vld [vmem:[%s9] sm:$0x1]
    %11 = vrot.lane.b32.xlu0 %v10, 48
    %v12 = vpop.permute.xlu0 %11
    %vm13 = vcmask 523648
    %14 = vst.msk [vmem:[#allocation0] sm:$0x1] %vm13, %v12
    %s15 = scalar_lea.vmem [#allocation1], 2
    %v16 = vld [vmem:[%s15] sm:$0x1]
    %17 = vrot.lane.b32.xlu0 %v16, 32
    %v18 = vpop.permute.xlu0 %17
    %vm19 = vcmask 392448
    %20 = vst.msk [vmem:[#allocation0] sm:$0x1] %vm19, %v18
    %s21 = scalar_lea.vmem [#allocation1], 1
    %v22 = vld [vmem:[%s21] sm:$0x1]
    %23 = vrot.lane.b32.xlu0 %v22, 16
    %v24 = vpop.permute.xlu0 %23
    %vm25 = vcmask 261248
    %26 = vst.msk [vmem:[#allocation0] sm:$0x1] %vm25, %v24
    %s28 = ssub.s32 2, 1
    %v29 = vld [vmem:[#allocation0] sm:%s28]
    %s31 = ssub.s32 2, 1
    %32 = vst [vmem:[%s1] sm:%s31] %v29

// kernel: upsampler_block.3
$region0: #{upsampler_block.3}
  #allocation0 [shape = 'u32[]', space=smem, size = 0x4, offset = 0x4, fixed_abs, tag = 'smem constant byte address 0x4 - core index']
  #allocation1 [shape = 'u32[72,128]{1,0:T(1,128)}', space=vmem, size = 0x9000, scoped, tag = 'internal scratch']
  %s0 = inlined_call_operand.vmem [shape: bf16[2,16,16,128], index: 0, kind: input, shape index: {}, may-alias: {0,3}]
  %s1 = inlined_call_operand.vmem [shape: f32[1,128], index: 1, kind: input, shape index: {}]
  %s2 = inlined_call_operand.vmem [shape: f32[1,128], index: 2, kind: input, shape index: {}]
  %s3 = inlined_call_operand.vmem [shape: bf16[2,16,16,128], index: 3, kind: output, shape index: {}, may-alias: {0,3}]
  %s4 = sld [smem:[#allocation0]]
  $region45: #{upsampler_block.3} parent=0
    _
  %s6 = ssub.s32 1, %s4
  %s7 = scalar_select 0, %s6, %s4
  loop: start=0, step=1, limit=4
  $region2: #{upsampler_block.3} parent=0 // loop_pre_header
    _
  $region3: #{upsampler_block.3} parent=0 // loop_header
    %s9 = sphi 0, %s13
    %p10 = scmp.ge.s32.totalorder %s9, 4
    %s19 = sphi 0, %s21
    %s22 = sphi 0, %s19
    %s23 = sphi 0, %s22
    %s39 = sphi 0, %s23
    %s43 = sphi 0, %s43
    %s45 = sphi 0, %s43
    %s46 = sphi 0, %s45
    %s60 = sphi 0, %s46
    %s64 = sphi 0, %s64
    %s66 = sphi 0, %s64
    %s67 = sphi 0, %s66
    %s81 = sphi 0, %s67
    %s87 = sphi 0, %s89
    %s90 = sphi 0, %s87
    %s91 = sphi 0, %s90
    %s107 = sphi 0, %s91
  $region4: #{upsampler_block.3} parent=0 // loop_header_branch
    %12 = sbr.rel (%p10) target = $region8
  $region5: #{upsampler_block.3} parent=0 // loop_body
    %s14 = ssub.s32 %s9, 1
    %s15 = ssub.s32 %s9, 2
    %s16 = sadd.s32 %s9, 1
    %s17 = ssub.s32 %s9, %s16
    %p18 = scmp.eq.s32.totalorder %s17, 0
    %s20 = sadd.s32 %s19, 1
    %s21 = scalar_select %p18, %s19, %s20
    %p24 = pneg %p18
    %p25 = scmp.eq.s32.totalorder %s9, 1
    %p26 = por %p24, %p25
    %p27 = scmp.ne.s32.totalorder %s19, %s22
    %p28 = scmp.eq.s32.totalorder %s9, 0
    %p29 = por %p27, %p28
    %p30 = scmp.ne.s32.totalorder %s19, %s22
    %p31 = scmp.eq.s32.totalorder %s14, 1
    %p32 = por %p30, %p31
    %p33 = scmp.ne.s32.totalorder %s22, %s23
    %p34 = scmp.eq.s32.totalorder %s14, 0
    %p35 = por %p33, %p34
    %p36 = scmp.ne.s32.totalorder %s22, %s23
    %p37 = scmp.eq.s32.totalorder %s15, 1
    %p38 = por %p36, %p37
    %p40 = scmp.ne.s32.totalorder %s23, %s39
    %p41 = scmp.eq.s32.totalorder %s15, 0
    %p42 = por %p40, %p41
    %s44 = sadd.s32 %s43, 1
    %p47 = scmp.eq.s32.totalorder %s9, 1
    %p48 = scmp.ne.s32.totalorder %s43, %s45
    %p49 = scmp.eq.s32.totalorder %s9, 0
    %p50 = por %p48, %p49
    %p51 = scmp.ne.s32.totalorder %s43, %s45
    %p52 = scmp.eq.s32.totalorder %s14, 1
    %p53 = por %p51, %p52
    %p54 = scmp.ne.s32.totalorder %s45, %s46
    %p55 = scmp.eq.s32.totalorder %s14, 0
    %p56 = por %p54, %p55
    %p57 = scmp.ne.s32.totalorder %s45, %s46
    %p58 = scmp.eq.s32.totalorder %s15, 1
    %p59 = por %p57, %p58
    %p61 = scmp.ne.s32.totalorder %s46, %s60
    %p62 = scmp.eq.s32.totalorder %s15, 0
    %p63 = por %p61, %p62
    %s65 = sadd.s32 %s64, 1
    %p68 = scmp.eq.s32.totalorder %s9, 1
    %p69 = scmp.ne.s32.totalorder %s64, %s66
    %p70 = scmp.eq.s32.totalorder %s9, 0
    %p71 = por %p69, %p70
    %p72 = scmp.ne.s32.totalorder %s64, %s66
    %p73 = scmp.eq.s32.totalorder %s14, 1
    %p74 = por %p72, %p73
    %p75 = scmp.ne.s32.totalorder %s66, %s67
    %p76 = scmp.eq.s32.totalorder %s14, 0
    %p77 = por %p75, %p76
    %p78 = scmp.ne.s32.totalorder %s66, %s67
    %p79 = scmp.eq.s32.totalorder %s15, 1
    %p80 = por %p78, %p79
    %p82 = scmp.ne.s32.totalorder %s67, %s81
    %p83 = scmp.eq.s32.totalorder %s15, 0
    %p84 = por %p82, %p83
    %s85 = ssub.s32 %s9, %s16
    %p86 = scmp.eq.s32.totalorder %s85, 0
    %s88 = sadd.s32 %s87, 1
    %s89 = scalar_select %p86, %s87, %s88
    %p92 = pneg %p86
    %p93 = scmp.eq.s32.totalorder %s9, 1
    %p94 = por %p92, %p93
    %p95 = scmp.ne.s32.totalorder %s87, %s90
    %p96 = scmp.eq.s32.totalorder %s9, 0
    %p97 = por %p95, %p96
    %p98 = scmp.ne.s32.totalorder %s87, %s90
    %p99 = scmp.eq.s32.totalorder %s14, 1
    %p100 = por %p98, %p99
    %p101 = scmp.ne.s32.totalorder %s90, %s91
    %p102 = scmp.eq.s32.totalorder %s14, 0
    %p103 = por %p101, %p102
    %p104 = scmp.ne.s32.totalorder %s90, %s91
    %p105 = scmp.eq.s32.totalorder %s15, 1
    %p106 = por %p104, %p105
    %p108 = scmp.ne.s32.totalorder %s91, %s107
    %p109 = scmp.eq.s32.totalorder %s15, 0
    %p110 = por %p108, %p109
    %p111 = scmp.le.s32.totalorder 1, %s9
    %p112 = scmp.lt.s32.totalorder %s9, 3
    %p113 = pnand %p111, %p112
    %p114 = pneg %p113
    // Predicated region
    $region9: #{upsampler_block.3} parent=5 // pred_check
      _
    $region10: #{upsampler_block.3} parent=5 // pred_check_branch
      %116 = sbr.rel (%p113) target = $region12
    $region11: #{upsampler_block.3} parent=5 // pred_region
      %s117 = ssub.s32 %s9, 1
      // Predicated region
      $region13: #{upsampler_block.3} parent=11 // pred_check
        %p118 = pneg %p56
      $region14: #{upsampler_block.3} parent=11 // pred_check_branch
        %120 = sbr.rel (%p118) target = $region16
      $region15: #{upsampler_block.3} parent=11 // pred_region
        _
      $region16: #{upsampler_block.3} parent=11 // pred_fallthru
        _
      // Predicated region
      $region17: #{upsampler_block.3} parent=11 // pred_check
        %p121 = pneg %p77
      $region18: #{upsampler_block.3} parent=11 // pred_check_branch
        %123 = sbr.rel (%p121) target = $region20
      $region19: #{upsampler_block.3} parent=11 // pred_region
        _
      $region20: #{upsampler_block.3} parent=11 // pred_fallthru
        _
    $region12: #{upsampler_block.3} parent=5 // pred_fallthru
      _
    %p124 = scmp.lt.s32.totalorder %s9, 2
    // Predicated region
    $region21: #{upsampler_block.3} parent=5 // pred_check
      %p125 = pneg %p124
    $region22: #{upsampler_block.3} parent=5 // pred_check_branch
      %127 = sbr.rel (%p125) target = $region24
    $region23: #{upsampler_block.3} parent=5 // pred_region
      // Predicated region
      $region25: #{upsampler_block.3} parent=23 // pred_check
        %p128 = pneg %p29
      $region26: #{upsampler_block.3} parent=23 // pred_check_branch
        %130 = sbr.rel (%p128) target = $region28
      $region27: #{upsampler_block.3} parent=23 // pred_region
        %p131 = scmp.lt.s32.totalorder %s9, 1
        %s132 = scalar_select %p131, %s9, 1
        %s133 = smul.addr %s132, 32
        %s134 = smul.addr %s133, 4
        %s135 = scalar_lea.vmem %s0, %s134
      $region28: #{upsampler_block.3} parent=23 // pred_fallthru
        _
    $region24: #{upsampler_block.3} parent=5 // pred_fallthru
      _
    %p136 = scmp.le.s32.totalorder 1, %s9
    %p137 = scmp.lt.s32.totalorder %s9, 3
    %p138 = pnand %p136, %p137
    %p139 = pneg %p138
    // Predicated region
    $region29: #{upsampler_block.3} parent=5 // pred_check
      _
    $region30: #{upsampler_block.3} parent=5 // pred_check_branch
      %141 = sbr.rel (%p138) target = $region32
    $region31: #{upsampler_block.3} parent=5 // pred_region
      %s142 = ssub.s32 %s9, 1
      %p143 = scmp.lt.s32.totalorder %s14, 1
      %s144 = scalar_select %p143, %s14, 1
      %s145 = smul.addr %s144, 32
      %s146 = smul.addr %s145, 4
      %s147 = scalar_lea.vmem %s0, %s146
      %p148 = pneg %p35
      %p149 = pneg %p32
      %p150 = pneg %p56
      %p151 = pneg %p53
      %p152 = pneg %p77
      %p153 = pneg %p74
      %p154 = pneg %p103
      %p155 = pneg %p100
      %p156 = scmp.lt.s32.totalorder %s14, 1
      %s157 = scalar_select %p156, %s14, 1
      %s158 = smul.addr %s157, 32
      %s159 = smul.addr %s158, 4
      %s160 = scalar_lea.vmem %s3, %s159
      %p161 = scmp.lt.s32.totalorder %s14, 1
      %s162 = scalar_select %p161, %s14, 1
      %s163 = smul.addr %s162, 32
      %s164 = smul.addr %s163, 4
      %s165 = scalar_lea.vmem %s0, %s164
      %p166 = scmp.lt.s32.totalorder %s14, 1
      %s167 = scalar_select %p166, %s14, 1
      %s168 = smul.addr %s167, 32
      %s169 = smul.addr %s168, 4
      %s170 = scalar_lea.vmem %s3, %s169
      %v171 = vld [vmem:[%s165] sm:$0xf]
      %v172 = vld [vmem:[%s165 + $0x4] sm:$0xf]
      %v173 = vld [vmem:[%s165 + $0x8] sm:$0xf]
      %v174 = vld [vmem:[%s165 + $0xc] sm:$0xf]
      %v175 = vld [vmem:[%s165 + $0x10] sm:$0xf]
      %v176 = vld [vmem:[%s165 + $0x14] sm:$0xf]
      %v177 = vld [vmem:[%s165 + $0x18] sm:$0xf]
      %v178 = vld [vmem:[%s165 + $0x1c] sm:$0xf]
      %v179 = vld [vmem:[%s165 + $0x20] sm:$0xf]
      %v180 = vld [vmem:[%s165 + $0x24] sm:$0xf]
      %v181 = vld [vmem:[%s165 + $0x28] sm:$0xf]
      %v182 = vld [vmem:[%s165 + $0x2c] sm:$0xf]
      %v183 = vld [vmem:[%s165 + $0x30] sm:$0xf]
      %v184 = vld [vmem:[%s165 + $0x34] sm:$0xf]
      %v185 = vld [vmem:[%s165 + $0x38] sm:$0xf]
      %v186 = vld [vmem:[%s165 + $0x3c] sm:$0xf]
      %v187 = vld [vmem:[%s165 + $0x40] sm:$0xf]
      %v188 = vld [vmem:[%s165 + $0x44] sm:$0xf]
      %v189 = vld [vmem:[%s165 + $0x48] sm:$0xf]
      %v190 = vld [vmem:[%s165 + $0x4c] sm:$0xf]
      %v191 = vld [vmem:[%s165 + $0x50] sm:$0xf]
      %v192 = vld [vmem:[%s165 + $0x54] sm:$0xf]
      %v193 = vld [vmem:[%s165 + $0x58] sm:$0xf]
      %v194 = vld [vmem:[%s165 + $0x5c] sm:$0xf]
      %v195 = vld [vmem:[%s165 + $0x60] sm:$0xf]
      %v196 = vld [vmem:[%s165 + $0x64] sm:$0xf]
      %v197 = vld [vmem:[%s165 + $0x68] sm:$0xf]
      %v198 = vld [vmem:[%s165 + $0x6c] sm:$0xf]
      %v199 = vld [vmem:[%s165 + $0x70] sm:$0xf]
      %v200 = vld [vmem:[%s165 + $0x74] sm:$0xf]
      %v201 = vld [vmem:[%s165 + $0x78] sm:$0xf]
      %v202 = vld [vmem:[%s165 + $0x7c] sm:$0xf]
      %v203 = vunpack.c.l.bf16 %v171
      %v204 = vunpack.c.l.bf16 %v172
      %v205 = vunpack.c.l.bf16 %v173
      %v206 = vunpack.c.l.bf16 %v174
      %v207 = vunpack.c.l.bf16 %v175
      %v208 = vunpack.c.l.bf16 %v176
      %v209 = vunpack.c.l.bf16 %v177
      %v210 = vunpack.c.l.bf16 %v178
      %v211 = vunpack.c.l.bf16 %v179
      %v212 = vunpack.c.l.bf16 %v180
      %v213 = vunpack.c.l.bf16 %v181
      %v214 = vunpack.c.l.bf16 %v182
      %v215 = vunpack.c.l.bf16 %v183
      %v216 = vunpack.c.l.bf16 %v184
      %v217 = vunpack.c.l.bf16 %v185
      %v218 = vunpack.c.l.bf16 %v186
      %v219 = vunpack.c.l.bf16 %v187
      %v220 = vunpack.c.l.bf16 %v188
      %v221 = vunpack.c.l.bf16 %v189
      %v222 = vunpack.c.l.bf16 %v190
      %v223 = vunpack.c.l.bf16 %v191
      %v224 = vunpack.c.l.bf16 %v192
      %v225 = vunpack.c.l.bf16 %v193
      %v226 = vunpack.c.l.bf16 %v194
      %v227 = vunpack.c.l.bf16 %v195
      %v228 = vunpack.c.l.bf16 %v196
      %v229 = vunpack.c.l.bf16 %v197
      %v230 = vunpack.c.l.bf16 %v198
      %v231 = vunpack.c.l.bf16 %v199
      %v232 = vunpack.c.l.bf16 %v200
      %v233 = vunpack.c.l.bf16 %v201
      %v234 = vunpack.c.l.bf16 %v202
      %v235 = vld [vmem:[%s1] sm:$0x1]
      %v237 = vperm.slane %v235, 0
      %v239 = vmul.f32 %v203, %v237
      %v240 = vmul.f32 %v204, %v237
      %v241 = vmul.f32 %v205, %v237
      %v242 = vmul.f32 %v206, %v237
      %v243 = vmul.f32 %v207, %v237
      %v244 = vmul.f32 %v208, %v237
      %v245 = vmul.f32 %v209, %v237
      %v246 = vmul.f32 %v210, %v237
      %v247 = vmul.f32 %v211, %v237
      %v248 = vmul.f32 %v212, %v237
      %v249 = vmul.f32 %v213, %v237
      %v250 = vmul.f32 %v214, %v237
      %v251 = vmul.f32 %v215, %v237
      %v252 = vmul.f32 %v216, %v237
      %v253 = vmul.f32 %v217, %v237
      %v254 = vmul.f32 %v218, %v237
      %v255 = vmul.f32 %v219, %v237
      %v256 = vmul.f32 %v220, %v237
      %v257 = vmul.f32 %v221, %v237
      %v258 = vmul.f32 %v222, %v237
      %v259 = vmul.f32 %v223, %v237
      %v260 = vmul.f32 %v224, %v237
      %v261 = vmul.f32 %v225, %v237
      %v262 = vmul.f32 %v226, %v237
      %v263 = vmul.f32 %v227, %v237
      %v264 = vmul.f32 %v228, %v237
      %v265 = vmul.f32 %v229, %v237
      %v266 = vmul.f32 %v230, %v237
      %v267 = vmul.f32 %v231, %v237
      %v268 = vmul.f32 %v232, %v237
      %v269 = vmul.f32 %v233, %v237
      %v270 = vmul.f32 %v234, %v237
      %v271 = vld [vmem:[%s2] sm:$0x1]
      %v273 = vperm.slane %v271, 0
      %v275 = vadd.f32 %v239, %v273
      %v276 = vadd.f32 %v240, %v273
      %v277 = vadd.f32 %v241, %v273
      %v278 = vadd.f32 %v242, %v273
      %v279 = vadd.f32 %v243, %v273
      %v280 = vadd.f32 %v244, %v273
      %v281 = vadd.f32 %v245, %v273
      %v282 = vadd.f32 %v246, %v273
      %v283 = vadd.f32 %v247, %v273
      %v284 = vadd.f32 %v248, %v273
      %v285 = vadd.f32 %v249, %v273
      %v286 = vadd.f32 %v250, %v273
      %v287 = vadd.f32 %v251, %v273
      %v288 = vadd.f32 %v252, %v273
      %v289 = vadd.f32 %v253, %v273
      %v290 = vadd.f32 %v254, %v273
      %v291 = vadd.f32 %v255, %v273
      %v292 = vadd.f32 %v256, %v273
      %v293 = vadd.f32 %v257, %v273
      %v294 = vadd.f32 %v258, %v273
      %v295 = vadd.f32 %v259, %v273
      %v296 = vadd.f32 %v260, %v273
      %v297 = vadd.f32 %v261, %v273
      %v298 = vadd.f32 %v262, %v273
      %v299 = vadd.f32 %v263, %v273
      %v300 = vadd.f32 %v264, %v273
      %v301 = vadd.f32 %v265, %v273
      %v302 = vadd.f32 %v266, %v273
      %v303 = vadd.f32 %v267, %v273
      %v304 = vadd.f32 %v268, %v273
      %v305 = vadd.f32 %v269, %v273
      %v306 = vadd.f32 %v270, %v273
      %v307 = vmax.f32 %v275, 0.0
      %v308 = vmax.f32 %v276, 0.0
      %v309 = vmax.f32 %v277, 0.0
      %v310 = vmax.f32 %v278, 0.0
      %v311 = vmax.f32 %v279, 0.0
      %v312 = vmax.f32 %v280, 0.0
      %v313 = vmax.f32 %v281, 0.0
      %v314 = vmax.f32 %v282, 0.0
      %v315 = vmax.f32 %v283, 0.0
      %v316 = vmax.f32 %v284, 0.0
      %v317 = vmax.f32 %v285, 0.0
      %v318 = vmax.f32 %v286, 0.0
      %v319 = vmax.f32 %v287, 0.0
      %v320 = vmax.f32 %v288, 0.0
      %v321 = vmax.f32 %v289, 0.0
      %v322 = vmax.f32 %v290, 0.0
      %v323 = vmax.f32 %v291, 0.0
      %v324 = vmax.f32 %v292, 0.0
      %v325 = vmax.f32 %v293, 0.0
      %v326 = vmax.f32 %v294, 0.0
      %v327 = vmax.f32 %v295, 0.0
      %v328 = vmax.f32 %v296, 0.0
      %v329 = vmax.f32 %v297, 0.0
      %v330 = vmax.f32 %v298, 0.0
      %v331 = vmax.f32 %v299, 0.0
      %v332 = vmax.f32 %v300, 0.0
      %v333 = vmax.f32 %v301, 0.0
      %v334 = vmax.f32 %v302, 0.0
      %v335 = vmax.f32 %v303, 0.0
      %v336 = vmax.f32 %v304, 0.0
      %v337 = vmax.f32 %v305, 0.0
      %v338 = vmax.f32 %v306, 0.0
      %v339 = vpack.c.bf16 %v307, %v307
      %v340 = vpack.c.bf16 %v308, %v308
      %v341 = vpack.c.bf16 %v309, %v309
      %v342 = vpack.c.bf16 %v310, %v310
      %v343 = vpack.c.bf16 %v311, %v311
      %v344 = vpack.c.bf16 %v312, %v312
      %v345 = vpack.c.bf16 %v313, %v313
      %v346 = vpack.c.bf16 %v314, %v314
      %v347 = vpack.c.bf16 %v315, %v315
      %v348 = vpack.c.bf16 %v316, %v316
      %v349 = vpack.c.bf16 %v317, %v317
      %v350 = vpack.c.bf16 %v318, %v318
      %v351 = vpack.c.bf16 %v319, %v319
      %v352 = vpack.c.bf16 %v320, %v320
      %v353 = vpack.c.bf16 %v321, %v321
      %v354 = vpack.c.bf16 %v322, %v322
      %v355 = vpack.c.bf16 %v323, %v323
      %v356 = vpack.c.bf16 %v324, %v324
      %v357 = vpack.c.bf16 %v325, %v325
      %v358 = vpack.c.bf16 %v326, %v326
      %v359 = vpack.c.bf16 %v327, %v327
      %v360 = vpack.c.bf16 %v328, %v328
      %v361 = vpack.c.bf16 %v329, %v329
      %v362 = vpack.c.bf16 %v330, %v330
      %v363 = vpack.c.bf16 %v331, %v331
      %v364 = vpack.c.bf16 %v332, %v332
      %v365 = vpack.c.bf16 %v333, %v333
      %v366 = vpack.c.bf16 %v334, %v334
      %v367 = vpack.c.bf16 %v335, %v335
      %v368 = vpack.c.bf16 %v336, %v336
      %v369 = vpack.c.bf16 %v337, %v337
      %v370 = vpack.c.bf16 %v338, %v338
      %371 = vst [vmem:[%s170] sm:$0xf] %v339
      %372 = vst [vmem:[%s170 + $0x4] sm:$0xf] %v340
      %373 = vst [vmem:[%s170 + $0x8] sm:$0xf] %v341
      %374 = vst [vmem:[%s170 + $0xc] sm:$0xf] %v342
      %375 = vst [vmem:[%s170 + $0x10] sm:$0xf] %v343
      %376 = vst [vmem:[%s170 + $0x14] sm:$0xf] %v344
      %377 = vst [vmem:[%s170 + $0x18] sm:$0xf] %v345
      %378 = vst [vmem:[%s170 + $0x1c] sm:$0xf] %v346
      %379 = vst [vmem:[%s170 + $0x20] sm:$0xf] %v347
      %380 = vst [vmem:[%s170 + $0x24] sm:$0xf] %v348
      %381 = vst [vmem:[%s170 + $0x28] sm:$0xf] %v349
      %382 = vst [vmem:[%s170 + $0x2c] sm:$0xf] %v350
      %383 = vst [vmem:[%s170 + $0x30] sm:$0xf] %v351
      %384 = vst [vmem:[%s170 + $0x34] sm:$0xf] %v352
      %385 = vst [vmem:[%s170 + $0x38] sm:$0xf] %v353
      %386 = vst [vmem:[%s170 + $0x3c] sm:$0xf] %v354
      %387 = vst [vmem:[%s170 + $0x40] sm:$0xf] %v355
      %388 = vst [vmem:[%s170 + $0x44] sm:$0xf] %v356
      %389 = vst [vmem:[%s170 + $0x48] sm:$0xf] %v357
      %390 = vst [vmem:[%s170 + $0x4c] sm:$0xf] %v358
      %391 = vst [vmem:[%s170 + $0x50] sm:$0xf] %v359
      %392 = vst [vmem:[%s170 + $0x54] sm:$0xf] %v360
      %393 = vst [vmem:[%s170 + $0x58] sm:$0xf] %v361
      %394 = vst [vmem:[%s170 + $0x5c] sm:$0xf] %v362
      %395 = vst [vmem:[%s170 + $0x60] sm:$0xf] %v363
      %396 = vst [vmem:[%s170 + $0x64] sm:$0xf] %v364
      %397 = vst [vmem:[%s170 + $0x68] sm:$0xf] %v365
      %398 = vst [vmem:[%s170 + $0x6c] sm:$0xf] %v366
      %399 = vst [vmem:[%s170 + $0x70] sm:$0xf] %v367
      %400 = vst [vmem:[%s170 + $0x74] sm:$0xf] %v368
      %401 = vst [vmem:[%s170 + $0x78] sm:$0xf] %v369
      %402 = vst [vmem:[%s170 + $0x7c] sm:$0xf] %v370
      %p403 = scmp.lt.s32.totalorder %s14, 1
      %s404 = scalar_select %p403, %s14, 1
      %s405 = smul.addr %s404, 32
      %s406 = smul.addr %s405, 4
      %s407 = scalar_lea.vmem %s3, %s406
      // Predicated region
      $region33: #{upsampler_block.3} parent=31 // pred_check
        %p408 = pneg %p100
      $region34: #{upsampler_block.3} parent=31 // pred_check_branch
        %410 = sbr.rel (%p408) target = $region36
      $region35: #{upsampler_block.3} parent=31 // pred_region
        _
      $region36: #{upsampler_block.3} parent=31 // pred_fallthru
        _
    $region32: #{upsampler_block.3} parent=5 // pred_fallthru
      _
    %p411 = scmp.le.s32.totalorder 2, %s9
    // Predicated region
    $region37: #{upsampler_block.3} parent=5 // pred_check
      %p412 = pneg %p411
    $region38: #{upsampler_block.3} parent=5 // pred_check_branch
      %414 = sbr.rel (%p412) target = $region40
    $region39: #{upsampler_block.3} parent=5 // pred_region
      %s415 = ssub.s32 %s9, 2
      // Predicated region
      $region41: #{upsampler_block.3} parent=39 // pred_check
        %p416 = pneg %p106
      $region42: #{upsampler_block.3} parent=39 // pred_check_branch
        %418 = sbr.rel (%p416) target = $region44
      $region43: #{upsampler_block.3} parent=39 // pred_region
        %p419 = scmp.lt.s32.totalorder %s15, 1
        %s420 = scalar_select %p419, %s15, 1
        %s421 = smul.addr %s420, 32
        %s422 = smul.addr %s421, 4
        %s423 = scalar_lea.vmem %s3, %s422
      $region44: #{upsampler_block.3} parent=39 // pred_fallthru
        _
    $region40: #{upsampler_block.3} parent=5 // pred_fallthru
      _
  $region6: #{upsampler_block.3} parent=0 // loop_footer
    %s13 = sadd.s32 1, %s9
  $region7: #{upsampler_block.3} parent=0 // loop_footer_branch
    %8 = sbr.rel target = $region3
  $region8: #{upsampler_block.3} parent=0 // loop_exit
    _

// kernel: upsampler_block.2
$region0: #{upsampler_block.2}
  #allocation0 [shape = 'u32[]', space=smem, size = 0x4, offset = 0x4, fixed_abs, tag = 'smem constant byte address 0x4 - core index']
  #allocation1 [shape = 'u32[72,128]{1,0:T(1,128)}', space=vmem, size = 0x9000, scoped, tag = 'internal scratch']
  %s0 = inlined_call_operand.vmem [shape: bf16[2,17,17,8], index: 0, kind: input, shape index: {}]
  %s1 = inlined_call_operand.vmem [shape: bf16[4,8,128], index: 1, kind: input, shape index: {}]
  %s2 = inlined_call_operand.vmem [shape: bf16[2,16,16,128], index: 2, kind: output, shape index: {0}]
  %s3 = inlined_call_operand.vmem [shape: f32[2,2,128], index: 3, kind: output, shape index: {1}]
  %4 = xla_tuple %s2, %s3
  %s5 = sld [smem:[#allocation0]]
  $region49: #{upsampler_block.2} parent=0
    _
  %s7 = ssub.s32 1, %s5
  %s8 = scalar_select 0, %s7, %s5
  loop: start=0, step=1, limit=4
  $region2: #{upsampler_block.2} parent=0 // loop_pre_header
    _
  $region3: #{upsampler_block.2} parent=0 // loop_header
    %s10 = sphi 0, %s14
    %p11 = scmp.ge.s32.totalorder %s10, 4
    %s20 = sphi 0, %s22
    %s23 = sphi 0, %s20
    %s24 = sphi 0, %s23
    %s40 = sphi 0, %s24
    %s44 = sphi 0, %s44
    %s46 = sphi 0, %s44
    %s47 = sphi 0, %s46
    %s61 = sphi 0, %s47
    %s67 = sphi 0, %s69
    %s70 = sphi 0, %s67
    %s71 = sphi 0, %s70
    %s87 = sphi 0, %s71
    %s93 = sphi 0, %s95
    %s96 = sphi 0, %s93
    %s97 = sphi 0, %s96
    %s113 = sphi 0, %s97
  $region4: #{upsampler_block.2} parent=0 // loop_header_branch
    %13 = sbr.rel (%p11) target = $region8
  $region5: #{upsampler_block.2} parent=0 // loop_body
    %s15 = ssub.s32 %s10, 1
    %s16 = ssub.s32 %s10, 2
    %s17 = sadd.s32 %s10, 1
    %s18 = ssub.s32 %s10, %s17
    %p19 = scmp.eq.s32.totalorder %s18, 0
    %s21 = sadd.s32 %s20, 1
    %s22 = scalar_select %p19, %s20, %s21
    %p25 = pneg %p19
    %p26 = scmp.eq.s32.totalorder %s10, 1
    %p27 = por %p25, %p26
    %p28 = scmp.ne.s32.totalorder %s20, %s23
    %p29 = scmp.eq.s32.totalorder %s10, 0
    %p30 = por %p28, %p29
    %p31 = scmp.ne.s32.totalorder %s20, %s23
    %p32 = scmp.eq.s32.totalorder %s15, 1
    %p33 = por %p31, %p32
    %p34 = scmp.ne.s32.totalorder %s23, %s24
    %p35 = scmp.eq.s32.totalorder %s15, 0
    %p36 = por %p34, %p35
    %p37 = scmp.ne.s32.totalorder %s23, %s24
    %p38 = scmp.eq.s32.totalorder %s16, 1
    %p39 = por %p37, %p38
    %p41 = scmp.ne.s32.totalorder %s24, %s40
    %p42 = scmp.eq.s32.totalorder %s16, 0
    %p43 = por %p41, %p42
    %s45 = sadd.s32 %s44, 1
    %p48 = scmp.eq.s32.totalorder %s10, 1
    %p49 = scmp.ne.s32.totalorder %s44, %s46
    %p50 = scmp.eq.s32.totalorder %s10, 0
    %p51 = por %p49, %p50
    %p52 = scmp.ne.s32.totalorder %s44, %s46
    %p53 = scmp.eq.s32.totalorder %s15, 1
    %p54 = por %p52, %p53
    %p55 = scmp.ne.s32.totalorder %s46, %s47
    %p56 = scmp.eq.s32.totalorder %s15, 0
    %p57 = por %p55, %p56
    %p58 = scmp.ne.s32.totalorder %s46, %s47
    %p59 = scmp.eq.s32.totalorder %s16, 1
    %p60 = por %p58, %p59
    %p62 = scmp.ne.s32.totalorder %s47, %s61
    %p63 = scmp.eq.s32.totalorder %s16, 0
    %p64 = por %p62, %p63
    %s65 = ssub.s32 %s10, %s17
    %p66 = scmp.eq.s32.totalorder %s65, 0
    %s68 = sadd.s32 %s67, 1
    %s69 = scalar_select %p66, %s67, %s68
    %p72 = pneg %p66
    %p73 = scmp.eq.s32.totalorder %s10, 1
    %p74 = por %p72, %p73
    %p75 = scmp.ne.s32.totalorder %s67, %s70
    %p76 = scmp.eq.s32.totalorder %s10, 0
    %p77 = por %p75, %p76
    %p78 = scmp.ne.s32.totalorder %s67, %s70
    %p79 = scmp.eq.s32.totalorder %s15, 1
    %p80 = por %p78, %p79
    %p81 = scmp.ne.s32.totalorder %s70, %s71
    %p82 = scmp.eq.s32.totalorder %s15, 0
    %p83 = por %p81, %p82
    %p84 = scmp.ne.s32.totalorder %s70, %s71
    %p85 = scmp.eq.s32.totalorder %s16, 1
    %p86 = por %p84, %p85
    %p88 = scmp.ne.s32.totalorder %s71, %s87
    %p89 = scmp.eq.s32.totalorder %s16, 0
    %p90 = por %p88, %p89
    %s91 = ssub.s32 %s10, %s17
    %p92 = scmp.eq.s32.totalorder %s91, 0
    %s94 = sadd.s32 %s93, 1
    %s95 = scalar_select %p92, %s93, %s94
    %p98 = pneg %p92
    %p99 = scmp.eq.s32.totalorder %s10, 1
    %p100 = por %p98, %p99
    %p101 = scmp.ne.s32.totalorder %s93, %s96
    %p102 = scmp.eq.s32.totalorder %s10, 0
    %p103 = por %p101, %p102
    %p104 = scmp.ne.s32.totalorder %s93, %s96
    %p105 = scmp.eq.s32.totalorder %s15, 1
    %p106 = por %p104, %p105
    %p107 = scmp.ne.s32.totalorder %s96, %s97
    %p108 = scmp.eq.s32.totalorder %s15, 0
    %p109 = por %p107, %p108
    %p110 = scmp.ne.s32.totalorder %s96, %s97
    %p111 = scmp.eq.s32.totalorder %s16, 1
    %p112 = por %p110, %p111
    %p114 = scmp.ne.s32.totalorder %s97, %s113
    %p115 = scmp.eq.s32.totalorder %s16, 0
    %p116 = por %p114, %p115
    %p117 = scmp.le.s32.totalorder 1, %s10
    %p118 = scmp.lt.s32.totalorder %s10, 3
    %p119 = pnand %p117, %p118
    %p120 = pneg %p119
    // Predicated region
    $region9: #{upsampler_block.2} parent=5 // pred_check
      _
    $region10: #{upsampler_block.2} parent=5 // pred_check_branch
      %122 = sbr.rel (%p119) target = $region12
    $region11: #{upsampler_block.2} parent=5 // pred_region
      %s123 = ssub.s32 %s10, 1
      // Predicated region
      $region13: #{upsampler_block.2} parent=11 // pred_check
        %p124 = pneg %p57
      $region14: #{upsampler_block.2} parent=11 // pred_check_branch
        %126 = sbr.rel (%p124) target = $region16
      $region15: #{upsampler_block.2} parent=11 // pred_region
        _
      $region16: #{upsampler_block.2} parent=11 // pred_fallthru
        _
    $region12: #{upsampler_block.2} parent=5 // pred_fallthru
      _
    %p127 = scmp.lt.s32.totalorder %s10, 2
    // Predicated region
    $region17: #{upsampler_block.2} parent=5 // pred_check
      %p128 = pneg %p127
    $region18: #{upsampler_block.2} parent=5 // pred_check_branch
      %130 = sbr.rel (%p128) target = $region20
    $region19: #{upsampler_block.2} parent=5 // pred_region
      // Predicated region
      $region21: #{upsampler_block.2} parent=19 // pred_check
        %p131 = pneg %p30
      $region22: #{upsampler_block.2} parent=19 // pred_check_branch
        %133 = sbr.rel (%p131) target = $region24
      $region23: #{upsampler_block.2} parent=19 // pred_region
        %p134 = scmp.lt.s32.totalorder %s10, 1
        %s135 = scalar_select %p134, %s10, 1
        %s136 = smul.addr %s135, 51
        %s137 = smul.addr %s136, 4
        %s138 = scalar_lea.vmem %s0, %s137
      $region24: #{upsampler_block.2} parent=19 // pred_fallthru
        _
    $region20: #{upsampler_block.2} parent=5 // pred_fallthru
      _
    %p139 = scmp.le.s32.totalorder 1, %s10
    %p140 = scmp.lt.s32.totalorder %s10, 3
    %p141 = pnand %p139, %p140
    %p142 = pneg %p141
    // Predicated region
    $region25: #{upsampler_block.2} parent=5 // pred_check
      _
    $region26: #{upsampler_block.2} parent=5 // pred_check_branch
      %144 = sbr.rel (%p141) target = $region28
    $region27: #{upsampler_block.2} parent=5 // pred_region
      %s145 = ssub.s32 %s10, 1
      %p146 = scmp.lt.s32.totalorder %s15, 1
      %s147 = scalar_select %p146, %s15, 1
      %s148 = smul.addr %s147, 51
      %s149 = smul.addr %s148, 4
      %s150 = scalar_lea.vmem %s0, %s149
      %p151 = pneg %p36
      %p152 = pneg %p33
      %p153 = pneg %p57
      %p154 = pneg %p54
      %p155 = pneg %p83
      %p156 = pneg %p80
      %p157 = scmp.lt.s32.totalorder %s15, 1
      %s158 = scalar_select %p157, %s15, 1
      %s159 = smul.addr %s158, 32
      %s160 = smul.addr %s159, 4
      %s161 = scalar_lea.vmem %s2, %s160
      %p162 = pneg %p109
      %p163 = pneg %p106
      %p164 = scmp.lt.s32.totalorder %s15, 1
      %s165 = scalar_select %p164, %s15, 1
      %s166 = smul.addr %s165, 2
      %s167 = scalar_lea.vmem %s3, %s166
      %p168 = scmp.lt.s32.totalorder %s15, 1
      %s169 = scalar_select %p168, %s15, 1
      %s170 = smul.addr %s169, 51
      %s171 = smul.addr %s170, 4
      %s172 = scalar_lea.vmem %s0, %s171
      %p173 = scmp.lt.s32.totalorder %s15, 1
      %s174 = scalar_select %p173, %s15, 1
      %s175 = smul.addr %s174, 32
      %s176 = smul.addr %s175, 4
      %s177 = scalar_lea.vmem %s2, %s176
      %p178 = scmp.lt.s32.totalorder %s15, 1
      %s179 = scalar_select %p178, %s15, 1
      %s180 = smul.addr %s179, 2
      %s181 = scalar_lea.vmem %s3, %s180
      %v183 = vld [vmem:[%s172] sm:$0xf]
      %v184 = vld [vmem:[%s172 + $0x4] sm:$0xf]
      %v185 = vld [vmem:[%s172 + $0x8] sm:$0x1]
      %v186 = vld [vmem:[%s172 + $0xc] sm:$0xf]
      %v187 = vld [vmem:[%s172 + $0x10] sm:$0xf]
      %v188 = vld [vmem:[%s172 + $0x14] sm:$0x1]
      %v189 = vld [vmem:[%s172 + $0x18] sm:$0xf]
      %v190 = vld [vmem:[%s172 + $0x1c] sm:$0xf]
      %v191 = vld [vmem:[%s172 + $0x20] sm:$0x1]
      %v192 = vld [vmem:[%s172 + $0x24] sm:$0xf]
      %v193 = vld [vmem:[%s172 + $0x28] sm:$0xf]
      %v194 = vld [vmem:[%s172 + $0x2c] sm:$0x1]
      %v195 = vld [vmem:[%s172 + $0x30] sm:$0xf]
      %v196 = vld [vmem:[%s172 + $0x34] sm:$0xf]
      %v197 = vld [vmem:[%s172 + $0x38] sm:$0x1]
      %v198 = vld [vmem:[%s172 + $0x3c] sm:$0xf]
      %v199 = vld [vmem:[%s172 + $0x40] sm:$0xf]
      %v200 = vld [vmem:[%s172 + $0x44] sm:$0x1]
      %v201 = vld [vmem:[%s172 + $0x48] sm:$0xf]
      %v202 = vld [vmem:[%s172 + $0x4c] sm:$0xf]
      %v203 = vld [vmem:[%s172 + $0x50] sm:$0x1]
      %v204 = vld [vmem:[%s172 + $0x54] sm:$0xf]
      %v205 = vld [vmem:[%s172 + $0x58] sm:$0xf]
      %v206 = vld [vmem:[%s172 + $0x5c] sm:$0x1]
      %v207 = vld [vmem:[%s172 + $0x60] sm:$0xf]
      %v208 = vld [vmem:[%s172 + $0x64] sm:$0xf]
      %v209 = vld [vmem:[%s172 + $0x68] sm:$0x1]
      %v210 = vld [vmem:[%s172 + $0x6c] sm:$0xf]
      %v211 = vld [vmem:[%s172 + $0x70] sm:$0xf]
      %v212 = vld [vmem:[%s172 + $0x74] sm:$0x1]
      %v213 = vld [vmem:[%s172 + $0x78] sm:$0xf]
      %v214 = vld [vmem:[%s172 + $0x7c] sm:$0xf]
      %v215 = vld [vmem:[%s172 + $0x80] sm:$0x1]
      %v216 = vld [vmem:[%s172 + $0x84] sm:$0xf]
      %v217 = vld [vmem:[%s172 + $0x88] sm:$0xf]
      %v218 = vld [vmem:[%s172 + $0x8c] sm:$0x1]
      %v219 = vld [vmem:[%s172 + $0x90] sm:$0xf]
      %v220 = vld [vmem:[%s172 + $0x94] sm:$0xf]
      %v221 = vld [vmem:[%s172 + $0x98] sm:$0x1]
      %v222 = vld [vmem:[%s172 + $0x9c] sm:$0xf]
      %v223 = vld [vmem:[%s172 + $0xa0] sm:$0xf]
      %v224 = vld [vmem:[%s172 + $0xa4] sm:$0x1]
      %v225 = vld [vmem:[%s172 + $0xa8] sm:$0xf]
      %v226 = vld [vmem:[%s172 + $0xac] sm:$0xf]
      %v227 = vld [vmem:[%s172 + $0xb0] sm:$0x1]
      %v228 = vld [vmem:[%s172 + $0xb4] sm:$0xf]
      %v229 = vld [vmem:[%s172 + $0xb8] sm:$0xf]
      %v230 = vld [vmem:[%s172 + $0xbc] sm:$0x1]
      %v231 = vld [vmem:[%s172 + $0xc0] sm:$0xf]
      %v232 = vld [vmem:[%s172 + $0xc4] sm:$0xf]
      %v233 = vld [vmem:[%s172 + $0xc8] sm:$0x1]
      %v234 = vld [vmem:[%s1] sm:$0xf]
      %vm235 = vsmask.f32 3328
      %vm236 = vsmask.f32 7440
      %vm237 = vmor %vm235, %vm236
      %v239 = vshrl.u32 %v183, 16
      %v241 = vrot.slane %v239, 4
      %v242 = vshll.u32 %v183, 16
      %v244 = vrot.slane %v242, 5
      %v245 = vor.u32 %v241, %v244
      %v246 = vrot.slane %v245, 4
      %v248 = vshll.u32 %v184, 16
      %v250 = vrot.slane %v248, 5
      %v251 = vsel %vm237, %v246, %v250
      %v252 = vshrl.u32 %v184, 16
      %v254 = vrot.slane %v252, 4
      %v255 = vor.u32 %v254, %v250
      %v256 = vrot.slane %v255, 4
      %v258 = vshll.u32 %v185, 16
      %v260 = vrot.slane %v258, 5
      %v261 = vsel %vm237, %v256, %v260
      %v263 = vshrl.u32 %v186, 16
      %v265 = vrot.slane %v263, 4
      %v266 = vshll.u32 %v186, 16
      %v268 = vrot.slane %v266, 5
      %v269 = vor.u32 %v265, %v268
      %v270 = vrot.slane %v269, 4
      %v272 = vshll.u32 %v187, 16
      %v274 = vrot.slane %v272, 5
      %v275 = vsel %vm237, %v270, %v274
      %v276 = vshrl.u32 %v187, 16
      %v278 = vrot.slane %v276, 4
      %v279 = vor.u32 %v278, %v274
      %v280 = vrot.slane %v279, 4
      %v282 = vshll.u32 %v188, 16
      %v284 = vrot.slane %v282, 5
      %v285 = vsel %vm237, %v280, %v284
      %v287 = vshrl.u32 %v189, 16
      %v289 = vrot.slane %v287, 4
      %v290 = vshll.u32 %v189, 16
      %v292 = vrot.slane %v290, 5
      %v293 = vor.u32 %v289, %v292
      %v294 = vrot.slane %v293, 4
      %v296 = vshll.u32 %v190, 16
      %v298 = vrot.slane %v296, 5
      %v299 = vsel %vm237, %v294, %v298
      %v300 = vshrl.u32 %v190, 16
      %v302 = vrot.slane %v300, 4
      %v303 = vor.u32 %v302, %v298
      %v304 = vrot.slane %v303, 4
      %v306 = vshll.u32 %v191, 16
      %v308 = vrot.slane %v306, 5
      %v309 = vsel %vm237, %v304, %v308
      %v311 = vshrl.u32 %v192, 16
      %v313 = vrot.slane %v311, 4
      %v314 = vshll.u32 %v192, 16
      %v316 = vrot.slane %v314, 5
      %v317 = vor.u32 %v313, %v316
      %v318 = vrot.slane %v317, 4
      %v320 = vshll.u32 %v193, 16
      %v322 = vrot.slane %v320, 5
      %v323 = vsel %vm237, %v318, %v322
      %v324 = vshrl.u32 %v193, 16
      %v326 = vrot.slane %v324, 4
      %v327 = vor.u32 %v326, %v322
      %v328 = vrot.slane %v327, 4
      %v330 = vshll.u32 %v194, 16
      %v332 = vrot.slane %v330, 5
      %v333 = vsel %vm237, %v328, %v332
      %v335 = vshrl.u32 %v195, 16
      %v337 = vrot.slane %v335, 4
      %v338 = vshll.u32 %v195, 16
      %v340 = vrot.slane %v338, 5
      %v341 = vor.u32 %v337, %v340
      %v342 = vrot.slane %v341, 4
      %v344 = vshll.u32 %v196, 16
      %v346 = vrot.slane %v344, 5
      %v347 = vsel %vm237, %v342, %v346
      %v348 = vshrl.u32 %v196, 16
      %v350 = vrot.slane %v348, 4
      %v351 = vor.u32 %v350, %v346
      %v352 = vrot.slane %v351, 4
      %v354 = vshll.u32 %v197, 16
      %v356 = vrot.slane %v354, 5
      %v357 = vsel %vm237, %v352, %v356
      %v359 = vshrl.u32 %v198, 16
      %v361 = vrot.slane %v359, 4
      %v362 = vshll.u32 %v198, 16
      %v364 = vrot.slane %v362, 5
      %v365 = vor.u32 %v361, %v364
      %v366 = vrot.slane %v365, 4
      %v368 = vshll.u32 %v199, 16
      %v370 = vrot.slane %v368, 5
      %v371 = vsel %vm237, %v366, %v370
      %v372 = vshrl.u32 %v199, 16
      %v374 = vrot.slane %v372, 4
      %v375 = vor.u32 %v374, %v370
      %v376 = vrot.slane %v375, 4
      %v378 = vshll.u32 %v200, 16
      %v380 = vrot.slane %v378, 5
      %v381 = vsel %vm237, %v376, %v380
      %v383 = vshrl.u32 %v201, 16
      %v385 = vrot.slane %v383, 4
      %v386 = vshll.u32 %v201, 16
      %v388 = vrot.slane %v386, 5
      %v389 = vor.u32 %v385, %v388
      %v390 = vrot.slane %v389, 4
      %v392 = vshll.u32 %v202, 16
      %v394 = vrot.slane %v392, 5
      %v395 = vsel %vm237, %v390, %v394
      %v396 = vshrl.u32 %v202, 16
      %v398 = vrot.slane %v396, 4
      %v399 = vor.u32 %v398, %v394
      %v400 = vrot.slane %v399, 4
      %v402 = vshll.u32 %v203, 16
      %v404 = vrot.slane %v402, 5
      %v405 = vsel %vm237, %v400, %v404
      %v407 = vshrl.u32 %v204, 16
      %v409 = vrot.slane %v407, 4
      %v410 = vshll.u32 %v204, 16
      %v412 = vrot.slane %v410, 5
      %v413 = vor.u32 %v409, %v412
      %v414 = vrot.slane %v413, 4
      %v416 = vshll.u32 %v205, 16
      %v418 = vrot.slane %v416, 5
      %v419 = vsel %vm237, %v414, %v418
      %v420 = vshrl.u32 %v205, 16
      %v422 = vrot.slane %v420, 4
      %v423 = vor.u32 %v422, %v418
      %v424 = vrot.slane %v423, 4
      %v426 = vshll.u32 %v206, 16
      %v428 = vrot.slane %v426, 5
      %v429 = vsel %vm237, %v424, %v428
      %v431 = vshrl.u32 %v207, 16
      %v433 = vrot.slane %v431, 4
      %v434 = vshll.u32 %v207, 16
      %v436 = vrot.slane %v434, 5
      %v437 = vor.u32 %v433, %v436
      %v438 = vrot.slane %v437, 4
      %v440 = vshll.u32 %v208, 16
      %v442 = vrot.slane %v440, 5
      %v443 = vsel %vm237, %v438, %v442
      %v444 = vshrl.u32 %v208, 16
      %v446 = vrot.slane %v444, 4
      %v447 = vor.u32 %v446, %v442
      %v448 = vrot.slane %v447, 4
      %v450 = vshll.u32 %v209, 16
      %v452 = vrot.slane %v450, 5
      %v453 = vsel %vm237, %v448, %v452
      %v455 = vshrl.u32 %v210, 16
      %v457 = vrot.slane %v455, 4
      %v458 = vshll.u32 %v210, 16
      %v460 = vrot.slane %v458, 5
      %v461 = vor.u32 %v457, %v460
      %v462 = vrot.slane %v461, 4
      %v464 = vshll.u32 %v211, 16
      %v466 = vrot.slane %v464, 5
      %v467 = vsel %vm237, %v462, %v466
      %v468 = vshrl.u32 %v211, 16
      %v470 = vrot.slane %v468, 4
      %v471 = vor.u32 %v470, %v466
      %v472 = vrot.slane %v471, 4
      %v474 = vshll.u32 %v212, 16
      %v476 = vrot.slane %v474, 5
      %v477 = vsel %vm237, %v472, %v476
      %v479 = vshrl.u32 %v213, 16
      %v481 = vrot.slane %v479, 4
      %v482 = vshll.u32 %v213, 16
      %v484 = vrot.slane %v482, 5
      %v485 = vor.u32 %v481, %v484
      %v486 = vrot.slane %v485, 4
      %v488 = vshll.u32 %v214, 16
      %v490 = vrot.slane %v488, 5
      %v491 = vsel %vm237, %v486, %v490
      %v492 = vshrl.u32 %v214, 16
      %v494 = vrot.slane %v492, 4
      %v495 = vor.u32 %v494, %v490
      %v496 = vrot.slane %v495, 4
      %v498 = vshll.u32 %v215, 16
      %v500 = vrot.slane %v498, 5
      %v501 = vsel %vm237, %v496, %v500
      %v503 = vshrl.u32 %v216, 16
      %v505 = vrot.slane %v503, 4
      %v506 = vshll.u32 %v216, 16
      %v508 = vrot.slane %v506, 5
      %v509 = vor.u32 %v505, %v508
      %v510 = vrot.slane %v509, 4
      %v512 = vshll.u32 %v217, 16
      %v514 = vrot.slane %v512, 5
      %v515 = vsel %vm237, %v510, %v514
      %v516 = vshrl.u32 %v217, 16
      %v518 = vrot.slane %v516, 4
      %v519 = vor.u32 %v518, %v514
      %v520 = vrot.slane %v519, 4
      %v522 = vshll.u32 %v218, 16
      %v524 = vrot.slane %v522, 5
      %v525 = vsel %vm237, %v520, %v524
      %v527 = vshrl.u32 %v219, 16
      %v529 = vrot.slane %v527, 4
      %v530 = vshll.u32 %v219, 16
      %v532 = vrot.slane %v530, 5
      %v533 = vor.u32 %v529, %v532
      %v534 = vrot.slane %v533, 4
      %v536 = vshll.u32 %v220, 16
      %v538 = vrot.slane %v536, 5
      %v539 = vsel %vm237, %v534, %v538
      %v540 = vshrl.u32 %v220, 16
      %v542 = vrot.slane %v540, 4
      %v543 = vor.u32 %v542, %v538
      %v544 = vrot.slane %v543, 4
      %v546 = vshll.u32 %v221, 16
      %v548 = vrot.slane %v546, 5
      %v549 = vsel %vm237, %v544, %v548
      %v551 = vshrl.u32 %v222, 16
      %v553 = vrot.slane %v551, 4
      %v554 = vshll.u32 %v222, 16
      %v556 = vrot.slane %v554, 5
      %v557 = vor.u32 %v553, %v556
      %v558 = vrot.slane %v557, 4
      %v560 = vshll.u32 %v223, 16
      %v562 = vrot.slane %v560, 5
      %v563 = vsel %vm237, %v558, %v562
      %v564 = vshrl.u32 %v223, 16
      %v566 = vrot.slane %v564, 4
      %v567 = vor.u32 %v566, %v562
      %v568 = vrot.slane %v567, 4
      %v570 = vshll.u32 %v224, 16
      %v572 = vrot.slane %v570, 5
      %v573 = vsel %vm237, %v568, %v572
      %v575 = vshrl.u32 %v225, 16
      %v577 = vrot.slane %v575, 4
      %v578 = vshll.u32 %v225, 16
      %v580 = vrot.slane %v578, 5
      %v581 = vor.u32 %v577, %v580
      %v582 = vrot.slane %v581, 4
      %v584 = vshll.u32 %v226, 16
      %v586 = vrot.slane %v584, 5
      %v587 = vsel %vm237, %v582, %v586
      %v588 = vshrl.u32 %v226, 16
      %v590 = vrot.slane %v588, 4
      %v591 = vor.u32 %v590, %v586
      %v592 = vrot.slane %v591, 4
      %v594 = vshll.u32 %v227, 16
      %v596 = vrot.slane %v594, 5
      %v597 = vsel %vm237, %v592, %v596
      %v599 = vshrl.u32 %v228, 16
      %v601 = vrot.slane %v599, 4
      %v602 = vshll.u32 %v228, 16
      %v604 = vrot.slane %v602, 5
      %v605 = vor.u32 %v601, %v604
      %v606 = vrot.slane %v605, 4
      %v608 = vshll.u32 %v229, 16
      %v610 = vrot.slane %v608, 5
      %v611 = vsel %vm237, %v606, %v610
      %v612 = vshrl.u32 %v229, 16
      %v614 = vrot.slane %v612, 4
      %v615 = vor.u32 %v614, %v610
      %v616 = vrot.slane %v615, 4
      %v618 = vshll.u32 %v230, 16
      %v620 = vrot.slane %v618, 5
      %v621 = vsel %vm237, %v616, %v620
      %s622 = scalar_lea.vmem %s1, 4
      %v623 = vld [vmem:[%s622] sm:$0xf]
      %v624 = vunpack.c.l.b16 %v251
      %v625 = vunpack.c.l.b16 %v261
      %v626 = vunpack.c.l.b16 %v275
      %v627 = vunpack.c.l.b16 %v285
      %v628 = vunpack.c.l.b16 %v299
      %v629 = vunpack.c.l.b16 %v309
      %v630 = vunpack.c.l.b16 %v323
      %v631 = vunpack.c.l.b16 %v333
      %v632 = vunpack.c.l.b16 %v347
      %v633 = vunpack.c.l.b16 %v357
      %v634 = vunpack.c.l.b16 %v371
      %v635 = vunpack.c.l.b16 %v381
      %v636 = vunpack.c.l.b16 %v395
      %v637 = vunpack.c.l.b16 %v405
      %v638 = vunpack.c.l.b16 %v419
      %v639 = vunpack.c.l.b16 %v429
      %v640 = vunpack.c.l.b16 %v443
      %v641 = vunpack.c.l.b16 %v453
      %v642 = vunpack.c.l.b16 %v467
      %v643 = vunpack.c.l.b16 %v477
      %v644 = vunpack.c.l.b16 %v491
      %v645 = vunpack.c.l.b16 %v501
      %v646 = vunpack.c.l.b16 %v515
      %v647 = vunpack.c.l.b16 %v525
      %v648 = vunpack.c.l.b16 %v539
      %v649 = vunpack.c.l.b16 %v549
      %v650 = vunpack.c.l.b16 %v563
      %v651 = vunpack.c.l.b16 %v573
      %v652 = vunpack.c.l.b16 %v587
      %v653 = vunpack.c.l.b16 %v597
      %v654 = vunpack.c.l.b16 %v611
      %v655 = vunpack.c.l.b16 %v621
      %v656 = vpack.c.b16 %v625, %v624
      %v657 = vpack.c.b16 %v627, %v626
      %v658 = vpack.c.b16 %v629, %v628
      %v659 = vpack.c.b16 %v631, %v630
      %v660 = vpack.c.b16 %v633, %v632
      %v661 = vpack.c.b16 %v635, %v634
      %v662 = vpack.c.b16 %v637, %v636
      %v663 = vpack.c.b16 %v639, %v638
      %v664 = vpack.c.b16 %v641, %v640
      %v665 = vpack.c.b16 %v643, %v642
      %v666 = vpack.c.b16 %v645, %v644
      %v667 = vpack.c.b16 %v647, %v646
      %v668 = vpack.c.b16 %v649, %v648
      %v669 = vpack.c.b16 %v651, %v650
      %v670 = vpack.c.b16 %v653, %v652
      %v671 = vpack.c.b16 %v655, %v654
      %vm672 = vcmask 64512
      %v674 = vsel %vm672, %v656, 0
      %v677 = vsel %vm672, %v657, 0
      %v680 = vsel %vm672, %v658, 0
      %v683 = vsel %vm672, %v659, 0
      %v686 = vsel %vm672, %v660, 0
      %v689 = vsel %vm672, %v661, 0
      %v692 = vsel %vm672, %v662, 0
      %v695 = vsel %vm672, %v663, 0
      %v698 = vsel %vm672, %v664, 0
      %v701 = vsel %vm672, %v665, 0
      %v704 = vsel %vm672, %v666, 0
      %v707 = vsel %vm672, %v667, 0
      %v710 = vsel %vm672, %v668, 0
      %v713 = vsel %vm672, %v669, 0
      %v716 = vsel %vm672, %v670, 0
      %v719 = vsel %vm672, %v671, 0
      %vm721 = vcmask 1043456
      %v723 = vsel %vm721, %v623, 0
      %725 = vmatpush.bf16.msra.mxu0 0
      %726 = vmatpush.bf16.msra.mxu0 0
      %727 = vmatpush.bf16.msra.mxu0 0
      %728 = vmatpush.bf16.msra.mxu0 0
      %729 = vmatpush.bf16.msra.mxu0 0
      %730 = vmatpush.bf16.msra.mxu0 0
      %731 = vmatpush.bf16.msra.mxu0 0
      %732 = vmatpush.bf16.msra.mxu0 %v723
      %733 = vmatmul.bf16.gmra.mxu0 %v674
      %v734 = vpop.f32.mrf.mxu0
      %v735 = vadd.f32 0.0, %v734
      %v736 = vpop.f32.mrf.mxu0
      %v737 = vadd.f32 0.0, %v736
      %738 = vmatmul.bf16.gmra.mxu0 %v677
      %v739 = vpop.f32.mrf.mxu0
      %v740 = vadd.f32 0.0, %v739
      %v741 = vpop.f32.mrf.mxu0
      %v742 = vadd.f32 0.0, %v741
      %743 = vmatmul.bf16.gmra.mxu0 %v680
      %v744 = vpop.f32.mrf.mxu0
      %v745 = vadd.f32 0.0, %v744
      %v746 = vpop.f32.mrf.mxu0
      %v747 = vadd.f32 0.0, %v746
      %748 = vmatmul.bf16.gmra.mxu0 %v683
      %v749 = vpop.f32.mrf.mxu0
      %v750 = vadd.f32 0.0, %v749
      %v751 = vpop.f32.mrf.mxu0
      %v752 = vadd.f32 0.0, %v751
      %753 = vmatmul.bf16.gmra.mxu0 %v686
      %v754 = vpop.f32.mrf.mxu0
      %v755 = vadd.f32 0.0, %v754
      %v756 = vpop.f32.mrf.mxu0
      %v757 = vadd.f32 0.0, %v756
      %758 = vmatmul.bf16.gmra.mxu0 %v689
      %v759 = vpop.f32.mrf.mxu0
      %v760 = vadd.f32 0.0, %v759
      %v761 = vpop.f32.mrf.mxu0
      %v762 = vadd.f32 0.0, %v761
      %763 = vmatmul.bf16.gmra.mxu0 %v692
      %v764 = vpop.f32.mrf.mxu0
      %v765 = vadd.f32 0.0, %v764
      %v766 = vpop.f32.mrf.mxu0
      %v767 = vadd.f32 0.0, %v766
      %768 = vmatmul.bf16.gmra.mxu0 %v695
      %v769 = vpop.f32.mrf.mxu0
      %v770 = vadd.f32 0.0, %v769
      %v771 = vpop.f32.mrf.mxu0
      %v772 = vadd.f32 0.0, %v771
      %773 = vmatmul.bf16.gmra.mxu0 %v698
      %v774 = vpop.f32.mrf.mxu0
      %v775 = vadd.f32 0.0, %v774
      %v776 = vpop.f32.mrf.mxu0
      %v777 = vadd.f32 0.0, %v776
      %778 = vmatmul.bf16.gmra.mxu0 %v701
      %v779 = vpop.f32.mrf.mxu0
      %v780 = vadd.f32 0.0, %v779
      %v781 = vpop.f32.mrf.mxu0
      %v782 = vadd.f32 0.0, %v781
      %783 = vmatmul.bf16.gmra.mxu0 %v704
      %v784 = vpop.f32.mrf.mxu0
      %v785 = vadd.f32 0.0, %v784
      %v786 = vpop.f32.mrf.mxu0
      %v787 = vadd.f32 0.0, %v786
      %788 = vmatmul.bf16.gmra.mxu0 %v707
      %v789 = vpop.f32.mrf.mxu0
      %v790 = vadd.f32 0.0, %v789
      %v791 = vpop.f32.mrf.mxu0
      %v792 = vadd.f32 0.0, %v791
      %793 = vmatmul.bf16.gmra.mxu0 %v710
      %v794 = vpop.f32.mrf.mxu0
      %v795 = vadd.f32 0.0, %v794
      %v796 = vpop.f32.mrf.mxu0
      %v797 = vadd.f32 0.0, %v796
      %798 = vmatmul.bf16.gmra.mxu0 %v713
      %v799 = vpop.f32.mrf.mxu0
      %v800 = vadd.f32 0.0, %v799
      %v801 = vpop.f32.mrf.mxu0
      %v802 = vadd.f32 0.0, %v801
      %803 = vmatmul.bf16.gmra.mxu0 %v716
      %v804 = vpop.f32.mrf.mxu0
      %v805 = vadd.f32 0.0, %v804
      %v806 = vpop.f32.mrf.mxu0
      %v807 = vadd.f32 0.0, %v806
      %808 = vmatmul.bf16.gmra.mxu0 %v719
      %v809 = vpop.f32.mrf.mxu0
      %v810 = vadd.f32 0.0, %v809
      %v811 = vpop.f32.mrf.mxu0
      %v812 = vadd.f32 0.0, %v811
      %813 = vdwg.mxu0
      %v846 = vunpack.c.l.b16 %v183
      %v847 = vunpack.c.l.b16 %v184
      %v848 = vunpack.c.l.b16 %v186
      %v849 = vunpack.c.l.b16 %v187
      %v850 = vunpack.c.l.b16 %v189
      %v851 = vunpack.c.l.b16 %v190
      %v852 = vunpack.c.l.b16 %v192
      %v853 = vunpack.c.l.b16 %v193
      %v854 = vunpack.c.l.b16 %v195
      %v855 = vunpack.c.l.b16 %v196
      %v856 = vunpack.c.l.b16 %v198
      %v857 = vunpack.c.l.b16 %v199
      %v858 = vunpack.c.l.b16 %v201
      %v859 = vunpack.c.l.b16 %v202
      %v860 = vunpack.c.l.b16 %v204
      %v861 = vunpack.c.l.b16 %v205
      %v862 = vunpack.c.l.b16 %v207
      %v863 = vunpack.c.l.b16 %v208
      %v864 = vunpack.c.l.b16 %v210
      %v865 = vunpack.c.l.b16 %v211
      %v866 = vunpack.c.l.b16 %v213
      %v867 = vunpack.c.l.b16 %v214
      %v868 = vunpack.c.l.b16 %v216
      %v869 = vunpack.c.l.b16 %v217
      %v870 = vunpack.c.l.b16 %v219
      %v871 = vunpack.c.l.b16 %v220
      %v872 = vunpack.c.l.b16 %v222
      %v873 = vunpack.c.l.b16 %v223
      %v874 = vunpack.c.l.b16 %v225
      %v875 = vunpack.c.l.b16 %v226
      %v876 = vunpack.c.l.b16 %v228
      %v877 = vunpack.c.l.b16 %v229
      %v878 = vpack.c.b16 %v847, %v846
      %v879 = vpack.c.b16 %v849, %v848
      %v880 = vpack.c.b16 %v851, %v850
      %v881 = vpack.c.b16 %v853, %v852
      %v882 = vpack.c.b16 %v855, %v854
      %v883 = vpack.c.b16 %v857, %v856
      %v884 = vpack.c.b16 %v859, %v858
      %v885 = vpack.c.b16 %v861, %v860
      %v886 = vpack.c.b16 %v863, %v862
      %v887 = vpack.c.b16 %v865, %v864
      %v888 = vpack.c.b16 %v867, %v866
      %v889 = vpack.c.b16 %v869, %v868
      %v890 = vpack.c.b16 %v871, %v870
      %v891 = vpack.c.b16 %v873, %v872
      %v892 = vpack.c.b16 %v875, %v874
      %v893 = vpack.c.b16 %v877, %v876
      %v895 = vsel %vm672, %v878, 0
      %v898 = vsel %vm672, %v879, 0
      %v901 = vsel %vm672, %v880, 0
      %v904 = vsel %vm672, %v881, 0
      %v907 = vsel %vm672, %v882, 0
      %v910 = vsel %vm672, %v883, 0
      %v913 = vsel %vm672, %v884, 0
      %v916 = vsel %vm672, %v885, 0
      %v919 = vsel %vm672, %v886, 0
      %v922 = vsel %vm672, %v887, 0
      %v925 = vsel %vm672, %v888, 0
      %v928 = vsel %vm672, %v889, 0
      %v931 = vsel %vm672, %v890, 0
      %v934 = vsel %vm672, %v891, 0
      %v937 = vsel %vm672, %v892, 0
      %v940 = vsel %vm672, %v893, 0
      %v943 = vsel %vm721, %v234, 0
      %945 = vmatpush.bf16.msra.mxu0 0
      %946 = vmatpush.bf16.msra.mxu0 0
      %947 = vmatpush.bf16.msra.mxu0 0
      %948 = vmatpush.bf16.msra.mxu0 0
      %949 = vmatpush.bf16.msra.mxu0 0
      %950 = vmatpush.bf16.msra.mxu0 0
      %951 = vmatpush.bf16.msra.mxu0 0
      %952 = vmatpush.bf16.msra.mxu0 %v943
      %953 = vmatmul.bf16.gmra.mxu0 %v895
      %v954 = vpop.f32.mrf.mxu0
      %v955 = vadd.f32 %v735, %v954
      %v956 = vpop.f32.mrf.mxu0
      %v957 = vadd.f32 %v737, %v956
      %958 = vmatmul.bf16.gmra.mxu0 %v898
      %v959 = vpop.f32.mrf.mxu0
      %v960 = vadd.f32 %v740, %v959
      %v961 = vpop.f32.mrf.mxu0
      %v962 = vadd.f32 %v742, %v961
      %963 = vmatmul.bf16.gmra.mxu0 %v901
      %v964 = vpop.f32.mrf.mxu0
      %v965 = vadd.f32 %v745, %v964
      %v966 = vpop.f32.mrf.mxu0
      %v967 = vadd.f32 %v747, %v966
      %968 = vmatmul.bf16.gmra.mxu0 %v904
      %v969 = vpop.f32.mrf.mxu0
      %v970 = vadd.f32 %v750, %v969
      %v971 = vpop.f32.mrf.mxu0
      %v972 = vadd.f32 %v752, %v971
      %973 = vmatmul.bf16.gmra.mxu0 %v907
      %v974 = vpop.f32.mrf.mxu0
      %v975 = vadd.f32 %v755, %v974
      %v976 = vpop.f32.mrf.mxu0
      %v977 = vadd.f32 %v757, %v976
      %978 = vmatmul.bf16.gmra.mxu0 %v910
      %v979 = vpop.f32.mrf.mxu0
      %v980 = vadd.f32 %v760, %v979
      %v981 = vpop.f32.mrf.mxu0
      %v982 = vadd.f32 %v762, %v981
      %983 = vmatmul.bf16.gmra.mxu0 %v913
      %v984 = vpop.f32.mrf.mxu0
      %v985 = vadd.f32 %v765, %v984
      %v986 = vpop.f32.mrf.mxu0
      %v987 = vadd.f32 %v767, %v986
      %988 = vmatmul.bf16.gmra.mxu0 %v916
      %v989 = vpop.f32.mrf.mxu0
      %v990 = vadd.f32 %v770, %v989
      %v991 = vpop.f32.mrf.mxu0
      %v992 = vadd.f32 %v772, %v991
      %993 = vmatmul.bf16.gmra.mxu0 %v919
      %v994 = vpop.f32.mrf.mxu0
      %v995 = vadd.f32 %v775, %v994
      %v996 = vpop.f32.mrf.mxu0
      %v997 = vadd.f32 %v777, %v996
      %998 = vmatmul.bf16.gmra.mxu0 %v922
      %v999 = vpop.f32.mrf.mxu0
      %v1000 = vadd.f32 %v780, %v999
      %v1001 = vpop.f32.mrf.mxu0
      %v1002 = vadd.f32 %v782, %v1001
      %1003 = vmatmul.bf16.gmra.mxu0 %v925
      %v1004 = vpop.f32.mrf.mxu0
      %v1005 = vadd.f32 %v785, %v1004
      %v1006 = vpop.f32.mrf.mxu0
      %v1007 = vadd.f32 %v787, %v1006
      %1008 = vmatmul.bf16.gmra.mxu0 %v928
      %v1009 = vpop.f32.mrf.mxu0
      %v1010 = vadd.f32 %v790, %v1009
      %v1011 = vpop.f32.mrf.mxu0
      %v1012 = vadd.f32 %v792, %v1011
      %1013 = vmatmul.bf16.gmra.mxu0 %v931
      %v1014 = vpop.f32.mrf.mxu0
      %v1015 = vadd.f32 %v795, %v1014
      %v1016 = vpop.f32.mrf.mxu0
      %v1017 = vadd.f32 %v797, %v1016
      %1018 = vmatmul.bf16.gmra.mxu0 %v934
      %v1019 = vpop.f32.mrf.mxu0
      %v1020 = vadd.f32 %v800, %v1019
      %v1021 = vpop.f32.mrf.mxu0
      %v1022 = vadd.f32 %v802, %v1021
      %1023 = vmatmul.bf16.gmra.mxu0 %v937
      %v1024 = vpop.f32.mrf.mxu0
      %v1025 = vadd.f32 %v805, %v1024
      %v1026 = vpop.f32.mrf.mxu0
      %v1027 = vadd.f32 %v807, %v1026
      %1028 = vmatmul.bf16.gmra.mxu0 %v940
      %v1029 = vpop.f32.mrf.mxu0
      %v1030 = vadd.f32 %v810, %v1029
      %v1031 = vpop.f32.mrf.mxu0
      %v1032 = vadd.f32 %v812, %v1031
      %1033 = vdwg.mxu0
      %s1034 = scalar_lea.vmem %s1, 8
      %v1035 = vld [vmem:[%s1034] sm:$0xf]
      %v1038 = vunpack.c.l.b16 %v231
      %v1039 = vunpack.c.l.b16 %v232
      %v1040 = vpack.c.b16 %v1039, %v1038
      %v1042 = vsel %vm672, %v1040, 0
      %v1045 = vsel %vm721, %v1035, 0
      %1047 = vmatpush.bf16.msra.mxu0 0
      %1048 = vmatpush.bf16.msra.mxu0 0
      %1049 = vmatpush.bf16.msra.mxu0 0
      %1050 = vmatpush.bf16.msra.mxu0 0
      %1051 = vmatpush.bf16.msra.mxu0 0
      %1052 = vmatpush.bf16.msra.mxu0 0
      %1053 = vmatpush.bf16.msra.mxu0 0
      %1054 = vmatpush.bf16.msra.mxu0 %v1045
      %1055 = vmatmul.bf16.gmra.mxu0 %v898
      %v1056 = vpop.f32.mrf.mxu0
      %v1057 = vadd.f32 0.0, %v1056
      %v1058 = vpop.f32.mrf.mxu0
      %v1059 = vadd.f32 0.0, %v1058
      %1060 = vmatmul.bf16.gmra.mxu0 %v901
      %v1061 = vpop.f32.mrf.mxu0
      %v1062 = vadd.f32 0.0, %v1061
      %v1063 = vpop.f32.mrf.mxu0
      %v1064 = vadd.f32 0.0, %v1063
      %1065 = vmatmul.bf16.gmra.mxu0 %v904
      %v1066 = vpop.f32.mrf.mxu0
      %v1067 = vadd.f32 0.0, %v1066
      %v1068 = vpop.f32.mrf.mxu0
      %v1069 = vadd.f32 0.0, %v1068
      %1070 = vmatmul.bf16.gmra.mxu0 %v907
      %v1071 = vpop.f32.mrf.mxu0
      %v1072 = vadd.f32 0.0, %v1071
      %v1073 = vpop.f32.mrf.mxu0
      %v1074 = vadd.f32 0.0, %v1073
      %1075 = vmatmul.bf16.gmra.mxu0 %v910
      %v1076 = vpop.f32.mrf.mxu0
      %v1077 = vadd.f32 0.0, %v1076
      %v1078 = vpop.f32.mrf.mxu0
      %v1079 = vadd.f32 0.0, %v1078
      %1080 = vmatmul.bf16.gmra.mxu0 %v913
      %v1081 = vpop.f32.mrf.mxu0
      %v1082 = vadd.f32 0.0, %v1081
      %v1083 = vpop.f32.mrf.mxu0
      %v1084 = vadd.f32 0.0, %v1083
      %1085 = vmatmul.bf16.gmra.mxu0 %v916
      %v1086 = vpop.f32.mrf.mxu0
      %v1087 = vadd.f32 0.0, %v1086
      %v1088 = vpop.f32.mrf.mxu0
      %v1089 = vadd.f32 0.0, %v1088
      %1090 = vmatmul.bf16.gmra.mxu0 %v919
      %v1091 = vpop.f32.mrf.mxu0
      %v1092 = vadd.f32 0.0, %v1091
      %v1093 = vpop.f32.mrf.mxu0
      %v1094 = vadd.f32 0.0, %v1093
      %1095 = vmatmul.bf16.gmra.mxu0 %v922
      %v1096 = vpop.f32.mrf.mxu0
      %v1097 = vadd.f32 0.0, %v1096
      %v1098 = vpop.f32.mrf.mxu0
      %v1099 = vadd.f32 0.0, %v1098
      %1100 = vmatmul.bf16.gmra.mxu0 %v925
      %v1101 = vpop.f32.mrf.mxu0
      %v1102 = vadd.f32 0.0, %v1101
      %v1103 = vpop.f32.mrf.mxu0
      %v1104 = vadd.f32 0.0, %v1103
      %1105 = vmatmul.bf16.gmra.mxu0 %v928
      %v1106 = vpop.f32.mrf.mxu0
      %v1107 = vadd.f32 0.0, %v1106
      %v1108 = vpop.f32.mrf.mxu0
      %v1109 = vadd.f32 0.0, %v1108
      %1110 = vmatmul.bf16.gmra.mxu0 %v931
      %v1111 = vpop.f32.mrf.mxu0
      %v1112 = vadd.f32 0.0, %v1111
      %v1113 = vpop.f32.mrf.mxu0
      %v1114 = vadd.f32 0.0, %v1113
      %1115 = vmatmul.bf16.gmra.mxu0 %v934
      %v1116 = vpop.f32.mrf.mxu0
      %v1117 = vadd.f32 0.0, %v1116
      %v1118 = vpop.f32.mrf.mxu0
      %v1119 = vadd.f32 0.0, %v1118
      %1120 = vmatmul.bf16.gmra.mxu0 %v937
      %v1121 = vpop.f32.mrf.mxu0
      %v1122 = vadd.f32 0.0, %v1121
      %v1123 = vpop.f32.mrf.mxu0
      %v1124 = vadd.f32 0.0, %v1123
      %1125 = vmatmul.bf16.gmra.mxu0 %v940
      %v1126 = vpop.f32.mrf.mxu0
      %v1127 = vadd.f32 0.0, %v1126
      %v1128 = vpop.f32.mrf.mxu0
      %v1129 = vadd.f32 0.0, %v1128
      %1130 = vmatmul.bf16.gmra.mxu0 %v1042
      %v1131 = vpop.f32.mrf.mxu0
      %v1132 = vadd.f32 0.0, %v1131
      %v1133 = vpop.f32.mrf.mxu0
      %v1134 = vadd.f32 0.0, %v1133
      %1135 = vdwg.mxu0
      %v1136 = vadd.f32 %v955, %v1057
      %v1137 = vadd.f32 %v957, %v1059
      %v1138 = vadd.f32 %v960, %v1062
      %v1139 = vadd.f32 %v962, %v1064
      %v1140 = vadd.f32 %v965, %v1067
      %v1141 = vadd.f32 %v967, %v1069
      %v1142 = vadd.f32 %v970, %v1072
      %v1143 = vadd.f32 %v972, %v1074
      %v1144 = vadd.f32 %v975, %v1077
      %v1145 = vadd.f32 %v977, %v1079
      %v1146 = vadd.f32 %v980, %v1082
      %v1147 = vadd.f32 %v982, %v1084
      %v1148 = vadd.f32 %v985, %v1087
      %v1149 = vadd.f32 %v987, %v1089
      %v1150 = vadd.f32 %v990, %v1092
      %v1151 = vadd.f32 %v992, %v1094
      %v1152 = vadd.f32 %v995, %v1097
      %v1153 = vadd.f32 %v997, %v1099
      %v1154 = vadd.f32 %v1000, %v1102
      %v1155 = vadd.f32 %v1002, %v1104
      %v1156 = vadd.f32 %v1005, %v1107
      %v1157 = vadd.f32 %v1007, %v1109
      %v1158 = vadd.f32 %v1010, %v1112
      %v1159 = vadd.f32 %v1012, %v1114
      %v1160 = vadd.f32 %v1015, %v1117
      %v1161 = vadd.f32 %v1017, %v1119
      %v1162 = vadd.f32 %v1020, %v1122
      %v1163 = vadd.f32 %v1022, %v1124
      %v1164 = vadd.f32 %v1025, %v1127
      %v1165 = vadd.f32 %v1027, %v1129
      %v1166 = vadd.f32 %v1030, %v1132
      %v1167 = vadd.f32 %v1032, %v1134
      %v1169 = vshrl.u32 %v231, 16
      %v1171 = vrot.slane %v1169, 4
      %v1172 = vshll.u32 %v231, 16
      %v1174 = vrot.slane %v1172, 5
      %v1175 = vor.u32 %v1171, %v1174
      %v1176 = vrot.slane %v1175, 4
      %v1178 = vshll.u32 %v232, 16
      %v1180 = vrot.slane %v1178, 5
      %v1181 = vsel %vm237, %v1176, %v1180
      %v1182 = vshrl.u32 %v232, 16
      %v1184 = vrot.slane %v1182, 4
      %v1185 = vor.u32 %v1184, %v1180
      %v1186 = vrot.slane %v1185, 4
      %v1188 = vshll.u32 %v233, 16
      %v1190 = vrot.slane %v1188, 5
      %v1191 = vsel %vm237, %v1186, %v1190
      %s1192 = scalar_lea.vmem %s1, 12
      %v1193 = vld [vmem:[%s1192] sm:$0xf]
      %v1194 = vunpack.c.l.b16 %v1181
      %v1195 = vunpack.c.l.b16 %v1191
      %v1196 = vpack.c.b16 %v1195, %v1194
      %v1198 = vsel %vm672, %v1196, 0
      %v1201 = vsel %vm721, %v1193, 0
      %1203 = vmatpush.bf16.msra.mxu0 0
      %1204 = vmatpush.bf16.msra.mxu0 0
      %1205 = vmatpush.bf16.msra.mxu0 0
      %1206 = vmatpush.bf16.msra.mxu0 0
      %1207 = vmatpush.bf16.msra.mxu0 0
      %1208 = vmatpush.bf16.msra.mxu0 0
      %1209 = vmatpush.bf16.msra.mxu0 0
      %1210 = vmatpush.bf16.msra.mxu0 %v1201
      %1211 = vmatmul.bf16.gmra.mxu0 %v677
      %v1212 = vpop.f32.mrf.mxu0
      %v1213 = vadd.f32 0.0, %v1212
      %v1214 = vpop.f32.mrf.mxu0
      %v1215 = vadd.f32 0.0, %v1214
      %1216 = vmatmul.bf16.gmra.mxu0 %v680
      %v1217 = vpop.f32.mrf.mxu0
      %v1218 = vadd.f32 0.0, %v1217
      %v1219 = vpop.f32.mrf.mxu0
      %v1220 = vadd.f32 0.0, %v1219
      %1221 = vmatmul.bf16.gmra.mxu0 %v683
      %v1222 = vpop.f32.mrf.mxu0
      %v1223 = vadd.f32 0.0, %v1222
      %v1224 = vpop.f32.mrf.mxu0
      %v1225 = vadd.f32 0.0, %v1224
      %1226 = vmatmul.bf16.gmra.mxu0 %v686
      %v1227 = vpop.f32.mrf.mxu0
      %v1228 = vadd.f32 0.0, %v1227
      %v1229 = vpop.f32.mrf.mxu0
      %v1230 = vadd.f32 0.0, %v1229
      %1231 = vmatmul.bf16.gmra.mxu0 %v689
      %v1232 = vpop.f32.mrf.mxu0
      %v1233 = vadd.f32 0.0, %v1232
      %v1234 = vpop.f32.mrf.mxu0
      %v1235 = vadd.f32 0.0, %v1234
      %1236 = vmatmul.bf16.gmra.mxu0 %v692
      %v1237 = vpop.f32.mrf.mxu0
      %v1238 = vadd.f32 0.0, %v1237
      %v1239 = vpop.f32.mrf.mxu0
      %v1240 = vadd.f32 0.0, %v1239
      %1241 = vmatmul.bf16.gmra.mxu0 %v695
      %v1242 = vpop.f32.mrf.mxu0
      %v1243 = vadd.f32 0.0, %v1242
      %v1244 = vpop.f32.mrf.mxu0
      %v1245 = vadd.f32 0.0, %v1244
      %1246 = vmatmul.bf16.gmra.mxu0 %v698
      %v1247 = vpop.f32.mrf.mxu0
      %v1248 = vadd.f32 0.0, %v1247
      %v1249 = vpop.f32.mrf.mxu0
      %v1250 = vadd.f32 0.0, %v1249
      %1251 = vmatmul.bf16.gmra.mxu0 %v701
      %v1252 = vpop.f32.mrf.mxu0
      %v1253 = vadd.f32 0.0, %v1252
      %v1254 = vpop.f32.mrf.mxu0
      %v1255 = vadd.f32 0.0, %v1254
      %1256 = vmatmul.bf16.gmra.mxu0 %v704
      %v1257 = vpop.f32.mrf.mxu0
      %v1258 = vadd.f32 0.0, %v1257
      %v1259 = vpop.f32.mrf.mxu0
      %v1260 = vadd.f32 0.0, %v1259
      %1261 = vmatmul.bf16.gmra.mxu0 %v707
      %v1262 = vpop.f32.mrf.mxu0
      %v1263 = vadd.f32 0.0, %v1262
      %v1264 = vpop.f32.mrf.mxu0
      %v1265 = vadd.f32 0.0, %v1264
      %1266 = vmatmul.bf16.gmra.mxu0 %v710
      %v1267 = vpop.f32.mrf.mxu0
      %v1268 = vadd.f32 0.0, %v1267
      %v1269 = vpop.f32.mrf.mxu0
      %v1270 = vadd.f32 0.0, %v1269
      %1271 = vmatmul.bf16.gmra.mxu0 %v713
      %v1272 = vpop.f32.mrf.mxu0
      %v1273 = vadd.f32 0.0, %v1272
      %v1274 = vpop.f32.mrf.mxu0
      %v1275 = vadd.f32 0.0, %v1274
      %1276 = vmatmul.bf16.gmra.mxu0 %v716
      %v1277 = vpop.f32.mrf.mxu0
      %v1278 = vadd.f32 0.0, %v1277
      %v1279 = vpop.f32.mrf.mxu0
      %v1280 = vadd.f32 0.0, %v1279
      %1281 = vmatmul.bf16.gmra.mxu0 %v719
      %v1282 = vpop.f32.mrf.mxu0
      %v1283 = vadd.f32 0.0, %v1282
      %v1284 = vpop.f32.mrf.mxu0
      %v1285 = vadd.f32 0.0, %v1284
      %1286 = vmatmul.bf16.gmra.mxu0 %v1198
      %v1287 = vpop.f32.mrf.mxu0
      %v1288 = vadd.f32 0.0, %v1287
      %v1289 = vpop.f32.mrf.mxu0
      %v1290 = vadd.f32 0.0, %v1289
      %1291 = vdwg.mxu0
      %v1292 = vadd.f32 %v1136, %v1213
      %v1293 = vadd.f32 %v1137, %v1215
      %v1294 = vadd.f32 %v1138, %v1218
      %v1295 = vadd.f32 %v1139, %v1220
      %v1296 = vadd.f32 %v1140, %v1223
      %v1297 = vadd.f32 %v1141, %v1225
      %v1298 = vadd.f32 %v1142, %v1228
      %v1299 = vadd.f32 %v1143, %v1230
      %v1300 = vadd.f32 %v1144, %v1233
      %v1301 = vadd.f32 %v1145, %v1235
      %v1302 = vadd.f32 %v1146, %v1238
      %v1303 = vadd.f32 %v1147, %v1240
      %v1304 = vadd.f32 %v1148, %v1243
      %v1305 = vadd.f32 %v1149, %v1245
      %v1306 = vadd.f32 %v1150, %v1248
      %v1307 = vadd.f32 %v1151, %v1250
      %v1308 = vadd.f32 %v1152, %v1253
      %v1309 = vadd.f32 %v1153, %v1255
      %v1310 = vadd.f32 %v1154, %v1258
      %v1311 = vadd.f32 %v1155, %v1260
      %v1312 = vadd.f32 %v1156, %v1263
      %v1313 = vadd.f32 %v1157, %v1265
      %v1314 = vadd.f32 %v1158, %v1268
      %v1315 = vadd.f32 %v1159, %v1270
      %v1316 = vadd.f32 %v1160, %v1273
      %v1317 = vadd.f32 %v1161, %v1275
      %v1318 = vadd.f32 %v1162, %v1278
      %v1319 = vadd.f32 %v1163, %v1280
      %v1320 = vadd.f32 %v1164, %v1283
      %v1321 = vadd.f32 %v1165, %v1285
      %v1322 = vadd.f32 %v1166, %v1288
      %v1323 = vadd.f32 %v1167, %v1290
      %v1324 = vpack.c.bf16 %v1292, %v1292
      %v1325 = vpack.c.bf16 %v1293, %v1293
      %v1326 = vpack.c.bf16 %v1294, %v1294
      %v1327 = vpack.c.bf16 %v1295, %v1295
      %v1328 = vpack.c.bf16 %v1296, %v1296
      %v1329 = vpack.c.bf16 %v1297, %v1297
      %v1330 = vpack.c.bf16 %v1298, %v1298
      %v1331 = vpack.c.bf16 %v1299, %v1299
      %v1332 = vpack.c.bf16 %v1300, %v1300
      %v1333 = vpack.c.bf16 %v1301, %v1301
      %v1334 = vpack.c.bf16 %v1302, %v1302
      %v1335 = vpack.c.bf16 %v1303, %v1303
      %v1336 = vpack.c.bf16 %v1304, %v1304
      %v1337 = vpack.c.bf16 %v1305, %v1305
      %v1338 = vpack.c.bf16 %v1306, %v1306
      %v1339 = vpack.c.bf16 %v1307, %v1307
      %v1340 = vpack.c.bf16 %v1308, %v1308
      %v1341 = vpack.c.bf16 %v1309, %v1309
      %v1342 = vpack.c.bf16 %v1310, %v1310
      %v1343 = vpack.c.bf16 %v1311, %v1311
      %v1344 = vpack.c.bf16 %v1312, %v1312
      %v1345 = vpack.c.bf16 %v1313, %v1313
      %v1346 = vpack.c.bf16 %v1314, %v1314
      %v1347 = vpack.c.bf16 %v1315, %v1315
      %v1348 = vpack.c.bf16 %v1316, %v1316
      %v1349 = vpack.c.bf16 %v1317, %v1317
      %v1350 = vpack.c.bf16 %v1318, %v1318
      %v1351 = vpack.c.bf16 %v1319, %v1319
      %v1352 = vpack.c.bf16 %v1320, %v1320
      %v1353 = vpack.c.bf16 %v1321, %v1321
      %v1354 = vpack.c.bf16 %v1322, %v1322
      %v1355 = vpack.c.bf16 %v1323, %v1323
      %1356 = vst [vmem:[%s177] sm:$0xf] %v1324
      %1357 = vst [vmem:[%s177 + $0x4] sm:$0xf] %v1325
      %1358 = vst [vmem:[%s177 + $0x8] sm:$0xf] %v1326
      %1359 = vst [vmem:[%s177 + $0xc] sm:$0xf] %v1327
      %1360 = vst [vmem:[%s177 + $0x10] sm:$0xf] %v1328
      %1361 = vst [vmem:[%s177 + $0x14] sm:$0xf] %v1329
      %1362 = vst [vmem:[%s177 + $0x18] sm:$0xf] %v1330
      %1363 = vst [vmem:[%s177 + $0x1c] sm:$0xf] %v1331
      %1364 = vst [vmem:[%s177 + $0x20] sm:$0xf] %v1332
      %1365 = vst [vmem:[%s177 + $0x24] sm:$0xf] %v1333
      %1366 = vst [vmem:[%s177 + $0x28] sm:$0xf] %v1334
      %1367 = vst [vmem:[%s177 + $0x2c] sm:$0xf] %v1335
      %1368 = vst [vmem:[%s177 + $0x30] sm:$0xf] %v1336
      %1369 = vst [vmem:[%s177 + $0x34] sm:$0xf] %v1337
      %1370 = vst [vmem:[%s177 + $0x38] sm:$0xf] %v1338
      %1371 = vst [vmem:[%s177 + $0x3c] sm:$0xf] %v1339
      %1372 = vst [vmem:[%s177 + $0x40] sm:$0xf] %v1340
      %1373 = vst [vmem:[%s177 + $0x44] sm:$0xf] %v1341
      %1374 = vst [vmem:[%s177 + $0x48] sm:$0xf] %v1342
      %1375 = vst [vmem:[%s177 + $0x4c] sm:$0xf] %v1343
      %1376 = vst [vmem:[%s177 + $0x50] sm:$0xf] %v1344
      %1377 = vst [vmem:[%s177 + $0x54] sm:$0xf] %v1345
      %1378 = vst [vmem:[%s177 + $0x58] sm:$0xf] %v1346
      %1379 = vst [vmem:[%s177 + $0x5c] sm:$0xf] %v1347
      %1380 = vst [vmem:[%s177 + $0x60] sm:$0xf] %v1348
      %1381 = vst [vmem:[%s177 + $0x64] sm:$0xf] %v1349
      %1382 = vst [vmem:[%s177 + $0x68] sm:$0xf] %v1350
      %1383 = vst [vmem:[%s177 + $0x6c] sm:$0xf] %v1351
      %1384 = vst [vmem:[%s177 + $0x70] sm:$0xf] %v1352
      %1385 = vst [vmem:[%s177 + $0x74] sm:$0xf] %v1353
      %1386 = vst [vmem:[%s177 + $0x78] sm:$0xf] %v1354
      %1387 = vst [vmem:[%s177 + $0x7c] sm:$0xf] %v1355
      %v1388 = vadd.f32 %v1292, %v1293
      %v1389 = vadd.f32 %v1388, %v1294
      %v1390 = vadd.f32 %v1389, %v1295
      %v1391 = vadd.f32 %v1390, %v1296
      %v1392 = vadd.f32 %v1391, %v1297
      %v1393 = vadd.f32 %v1392, %v1298
      %v1394 = vadd.f32 %v1393, %v1299
      %v1395 = vadd.f32 %v1394, %v1300
      %v1396 = vadd.f32 %v1395, %v1301
      %v1397 = vadd.f32 %v1396, %v1302
      %v1398 = vadd.f32 %v1397, %v1303
      %v1399 = vadd.f32 %v1398, %v1304
      %v1400 = vadd.f32 %v1399, %v1305
      %v1401 = vadd.f32 %v1400, %v1306
      %v1402 = vadd.f32 %v1401, %v1307
      %v1403 = vadd.f32 %v1402, %v1308
      %v1404 = vadd.f32 %v1403, %v1309
      %v1405 = vadd.f32 %v1404, %v1310
      %v1406 = vadd.f32 %v1405, %v1311
      %v1407 = vadd.f32 %v1406, %v1312
      %v1408 = vadd.f32 %v1407, %v1313
      %v1409 = vadd.f32 %v1408, %v1314
      %v1410 = vadd.f32 %v1409, %v1315
      %v1411 = vadd.f32 %v1410, %v1316
      %v1412 = vadd.f32 %v1411, %v1317
      %v1413 = vadd.f32 %v1412, %v1318
      %v1414 = vadd.f32 %v1413, %v1319
      %v1415 = vadd.f32 %v1414, %v1320
      %v1416 = vadd.f32 %v1415, %v1321
      %v1417 = vadd.f32 %v1416, %v1322
      %v1418 = vadd.f32 %v1417, %v1323
      %v1419 = vrot.slane %v1418, 4
      %v1420 = vadd.f32 %v1418, %v1419
      %v1421 = vrot.slane %v1420, 2
      %v1422 = vadd.f32 %v1420, %v1421
      %v1423 = vrot.slane %v1422, 1
      %v1424 = vadd.f32 %v1422, %v1423
      %1425 = vst [vmem:[%s181] sm:$0x1] %v1424
      %v1426 = vmul.f32 %v1292, %v1292
      %v1427 = vmul.f32 %v1293, %v1293
      %v1428 = vmul.f32 %v1294, %v1294
      %v1429 = vmul.f32 %v1295, %v1295
      %v1430 = vmul.f32 %v1296, %v1296
      %v1431 = vmul.f32 %v1297, %v1297
      %v1432 = vmul.f32 %v1298, %v1298
      %v1433 = vmul.f32 %v1299, %v1299
      %v1434 = vmul.f32 %v1300, %v1300
      %v1435 = vmul.f32 %v1301, %v1301
      %v1436 = vmul.f32 %v1302, %v1302
      %v1437 = vmul.f32 %v1303, %v1303
      %v1438 = vmul.f32 %v1304, %v1304
      %v1439 = vmul.f32 %v1305, %v1305
      %v1440 = vmul.f32 %v1306, %v1306
      %v1441 = vmul.f32 %v1307, %v1307
      %v1442 = vmul.f32 %v1308, %v1308
      %v1443 = vmul.f32 %v1309, %v1309
      %v1444 = vmul.f32 %v1310, %v1310
      %v1445 = vmul.f32 %v1311, %v1311
      %v1446 = vmul.f32 %v1312, %v1312
      %v1447 = vmul.f32 %v1313, %v1313
      %v1448 = vmul.f32 %v1314, %v1314
      %v1449 = vmul.f32 %v1315, %v1315
      %v1450 = vmul.f32 %v1316, %v1316
      %v1451 = vmul.f32 %v1317, %v1317
      %v1452 = vmul.f32 %v1318, %v1318
      %v1453 = vmul.f32 %v1319, %v1319
      %v1454 = vmul.f32 %v1320, %v1320
      %v1455 = vmul.f32 %v1321, %v1321
      %v1456 = vmul.f32 %v1322, %v1322
      %v1457 = vmul.f32 %v1323, %v1323
      %v1458 = vadd.f32 %v1426, %v1427
      %v1459 = vadd.f32 %v1458, %v1428
      %v1460 = vadd.f32 %v1459, %v1429
      %v1461 = vadd.f32 %v1460, %v1430
      %v1462 = vadd.f32 %v1461, %v1431
      %v1463 = vadd.f32 %v1462, %v1432
      %v1464 = vadd.f32 %v1463, %v1433
      %v1465 = vadd.f32 %v1464, %v1434
      %v1466 = vadd.f32 %v1465, %v1435
      %v1467 = vadd.f32 %v1466, %v1436
      %v1468 = vadd.f32 %v1467, %v1437
      %v1469 = vadd.f32 %v1468, %v1438
      %v1470 = vadd.f32 %v1469, %v1439
      %v1471 = vadd.f32 %v1470, %v1440
      %v1472 = vadd.f32 %v1471, %v1441
      %v1473 = vadd.f32 %v1472, %v1442
      %v1474 = vadd.f32 %v1473, %v1443
      %v1475 = vadd.f32 %v1474, %v1444
      %v1476 = vadd.f32 %v1475, %v1445
      %v1477 = vadd.f32 %v1476, %v1446
      %v1478 = vadd.f32 %v1477, %v1447
      %v1479 = vadd.f32 %v1478, %v1448
      %v1480 = vadd.f32 %v1479, %v1449
      %v1481 = vadd.f32 %v1480, %v1450
      %v1482 = vadd.f32 %v1481, %v1451
      %v1483 = vadd.f32 %v1482, %v1452
      %v1484 = vadd.f32 %v1483, %v1453
      %v1485 = vadd.f32 %v1484, %v1454
      %v1486 = vadd.f32 %v1485, %v1455
      %v1487 = vadd.f32 %v1486, %v1456
      %v1488 = vadd.f32 %v1487, %v1457
      %v1489 = vrot.slane %v1488, 4
      %v1490 = vadd.f32 %v1488, %v1489
      %v1491 = vrot.slane %v1490, 2
      %v1492 = vadd.f32 %v1490, %v1491
      %v1493 = vrot.slane %v1492, 1
      %v1494 = vadd.f32 %v1492, %v1493
      %1495 = vst [vmem:[%s181 + $0x1] sm:$0x1] %v1494
      %p1496 = scmp.lt.s32.totalorder %s15, 1
      %s1497 = scalar_select %p1496, %s15, 1
      %s1498 = smul.addr %s1497, 32
      %s1499 = smul.addr %s1498, 4
      %s1500 = scalar_lea.vmem %s2, %s1499
      %p1501 = scmp.lt.s32.totalorder %s15, 1
      %s1502 = scalar_select %p1501, %s15, 1
      %s1503 = smul.addr %s1502, 2
      %s1504 = scalar_lea.vmem %s3, %s1503
      // Predicated region
      $region29: #{upsampler_block.2} parent=27 // pred_check
        %p1505 = pneg %p80
      $region30: #{upsampler_block.2} parent=27 // pred_check_branch
        %1507 = sbr.rel (%p1505) target = $region32
      $region31: #{upsampler_block.2} parent=27 // pred_region
        _
      $region32: #{upsampler_block.2} parent=27 // pred_fallthru
        _
      // Predicated region
      $region33: #{upsampler_block.2} parent=27 // pred_check
        %p1508 = pneg %p106
      $region34: #{upsampler_block.2} parent=27 // pred_check_branch
        %1510 = sbr.rel (%p1508) target = $region36
      $region35: #{upsampler_block.2} parent=27 // pred_region
        _
      $region36: #{upsampler_block.2} parent=27 // pred_fallthru
        _
    $region28: #{upsampler_block.2} parent=5 // pred_fallthru
      _
    %p1511 = scmp.le.s32.totalorder 2, %s10
    // Predicated region
    $region37: #{upsampler_block.2} parent=5 // pred_check
      %p1512 = pneg %p1511
    $region38: #{upsampler_block.2} parent=5 // pred_check_branch
      %1514 = sbr.rel (%p1512) target = $region40
    $region39: #{upsampler_block.2} parent=5 // pred_region
      %s1515 = ssub.s32 %s10, 2
      // Predicated region
      $region41: #{upsampler_block.2} parent=39 // pred_check
        %p1516 = pneg %p86
      $region42: #{upsampler_block.2} parent=39 // pred_check_branch
        %1518 = sbr.rel (%p1516) target = $region44
      $region43: #{upsampler_block.2} parent=39 // pred_region
        %p1519 = scmp.lt.s32.totalorder %s16, 1
        %s1520 = scalar_select %p1519, %s16, 1
        %s1521 = smul.addr %s1520, 32
        %s1522 = smul.addr %s1521, 4
        %s1523 = scalar_lea.vmem %s2, %s1522
      $region44: #{upsampler_block.2} parent=39 // pred_fallthru
        _
      // Predicated region
      $region45: #{upsampler_block.2} parent=39 // pred_check
        %p1524 = pneg %p112
      $region46: #{upsampler_block.2} parent=39 // pred_check_branch
        %1526 = sbr.rel (%p1524) target = $region48
      $region47: #{upsampler_block.2} parent=39 // pred_region
        %p1527 = scmp.lt.s32.totalorder %s16, 1
        %s1528 = scalar_select %p1527, %s16, 1
        %s1529 = smul.addr %s1528, 2
        %s1530 = scalar_lea.vmem %s3, %s1529
      $region48: #{upsampler_block.2} parent=39 // pred_fallthru
        _
    $region40: #{upsampler_block.2} parent=5 // pred_fallthru
      _
  $region6: #{upsampler_block.2} parent=0 // loop_footer
    %s14 = sadd.s32 1, %s10
  $region7: #{upsampler_block.2} parent=0 // loop_footer_branch
    %9 = sbr.rel target = $region3
  $region8: #{upsampler_block.2} parent=0 // loop_exit
    _

</llo_original>
